<compile_context>
chip_gen: v7x
topology: tpu7x:2x2x1
jax: 0.10.0
libtpu: 0.0.40
codegen_flags: <defaults>
</compile_context>

<pallas_src>
import functools

import jax
import jax.numpy as jnp
from jax.experimental import pallas as pl
from jax.experimental.pallas import tpu as pltpu


def _ssim_kernel(dr_ref, *refs, k1, k2, cov_norm, win_size,
                 n_x_planes, n_y_planes, W, Ho, Hop):
    x_refs = refs[:n_x_planes]
    y_refs = refs[n_x_planes:n_x_planes + n_y_planes]
    bv_ref, bh_ref, o_ref = refs[n_x_planes + n_y_planes:]

    def magnitude(plane_refs):
        # torch.abs for real inputs; |re + i*im| for complex-as-pair inputs.
        if len(plane_refs) == 2:
            a = plane_refs[0][0].astype(jnp.float32)
            b = plane_refs[1][0].astype(jnp.float32)
            return jnp.sqrt(a * a + b * b)
        return jnp.abs(plane_refs[0][0].astype(jnp.float32))

    x = magnitude(x_refs)                                  # (H, W) f32
    y = magnitude(y_refs)                                  # (H, W) f32

    n = pl.program_id(0)
    dr = dr_ref[n].astype(jnp.float32)                     # per-image data_range (SMEM)
    C1 = (k1 * dr) ** 2
    C2 = (k2 * dr) ** 2

    # Per-image mean-centering (f32).  (Co)variances are shift-invariant, so
    # this is exact math-wise while removing the bf16 cancellation hazard in
    # uxx - ux*ux; the means are added back for the luminance terms below.
    mx = jnp.mean(x, keepdims=True)                        # (1, 1)
    my = jnp.mean(y, keepdims=True)
    xc = x - mx
    yc = y - my

    # Fused vertical pass: one bf16 MXU matmul over all five maps stacked on lanes.
    a_stack = jnp.concatenate(
        [xc, yc, xc * xc, yc * yc, xc * yc], axis=1).astype(jnp.bfloat16)   # (H, 5W)
    bv = bv_ref[...]                                       # (Hop, H) bf16, exact {0,1}
    bh = bh_ref[...]                                       # (W, Wo)  bf16, exact {0,1}
    t = jnp.dot(bv, a_stack, preferred_element_type=jnp.float32)            # (Hop, 5W)

    # Restack the five (Hop, W) slabs along sublanes (Hop is a multiple of 8,
    # so slab boundaries stay aligned) and run the fused horizontal pass.
    t_stack = jnp.concatenate(
        [t[:, k * W:(k + 1) * W] for k in range(5)], axis=0).astype(jnp.bfloat16)
    inv_np = 1.0 / float(win_size * win_size)              # exact f32 normalization
    u_all = jnp.dot(t_stack, bh, preferred_element_type=jnp.float32) * inv_np  # (5*Hop, Wo)

    # Slice the Ho valid rows of each slab; the zero-padded Bv rows never reach S.
    uxc = u_all[0 * Hop:0 * Hop + Ho]
    uyc = u_all[1 * Hop:1 * Hop + Ho]
    uxx = u_all[2 * Hop:2 * Hop + Ho]
    uyy = u_all[3 * Hop:3 * Hop + Ho]
    uxy = u_all[4 * Hop:4 * Hop + Ho]

    ux = uxc + mx                                          # undo centering (luminance)
    uy = uyc + my
    ux2 = ux * ux
    uy2 = uy * uy

    A1 = 2.0 * (ux * uy) + C1
    B1 = ux2 + uy2 + C1
    # Folded-constant forms (no vx/vy/vxy temporaries):
    A2 = (2.0 * cov_norm) * (uxy - uxc * uyc) + C2
    B2 = cov_norm * ((uxx + uyy) - (uxc * uxc + uyc * uyc)) + C2

    d = B1 * B2
    r = pl.reciprocal(d, approx=True)                      # EUP slot
    r = r * (2.0 - d * r)                                  # one Newton step -> ~f32 accurate
    S = (A1 * A2) * r                                      # (Ho, Wo) SSIM map

    # Per-image partial sum; the 1 - mean epilogue happens outside the kernel.
    o_ref[0] = jnp.sum(S, keepdims=True)


def _as_planes(A):
    """Split an input into (N, H, W) planes; complex-as-pair -> (real, imag)."""
    if A.ndim == 5 and A.shape[-1] == 2:
        N, C, H, W, _ = A.shape
        assert C == 1, "expected NCHW(2) with C == 1"
        return (A[..., 0].reshape(N, H, W), A[..., 1].reshape(N, H, W))
    assert A.ndim == 4 and A.shape[1] == 1, "expected NCHW with C == 1"
    N, _, H, W = A.shape
    return (A.reshape(N, H, W),)


def ssim_loss(X, Y, data_range, *, win_size=7, k1=0.01, k2=0.03):
    """Pallas equivalent of SSIMLoss.forward.

    X, Y: (N, 1, H, W) real arrays, or (N, 1, H, W, 2) complex-as-real pairs.
    data_range: (N,) array.
    Returns a scalar float32: 1 - mean(SSIM map).
    """
    x_planes = _as_planes(X)
    y_planes = _as_planes(Y)
    N, H, W = x_planes[0].shape
    assert y_planes[0].shape == (N, H, W), "X and Y spatial shapes must match"

    Ho = H - win_size + 1
    Wo = W - win_size + 1
    assert Ho > 0 and Wo > 0, "image smaller than the SSIM window"
    Hop = ((Ho + 7) // 8) * 8                     # sublane-aligned vertical output rows

    dr = data_range.reshape(N).astype(jnp.float32)

    # Banded matrices with EXACT 1.0 entries (bf16-safe); rows of Bv beyond Ho
    # are zero padding.  The 1/win^2 normalization happens in f32 in-kernel.
    r = jax.lax.broadcasted_iota(jnp.int32, (Hop, H), 0)
    c = jax.lax.broadcasted_iota(jnp.int32, (Hop, H), 1)
    bv = jnp.where((r < Ho) & (c >= r) & (c < r + win_size),
                   1.0, 0.0).astype(jnp.bfloat16)
    rr = jax.lax.broadcasted_iota(jnp.int32, (W, Wo), 0)
    cc = jax.lax.broadcasted_iota(jnp.int32, (W, Wo), 1)
    bh = jnp.where((rr >= cc) & (rr < cc + win_size),
                   1.0, 0.0).astype(jnp.bfloat16)

    NP = win_size * win_size
    kernel = functools.partial(
        _ssim_kernel, k1=k1, k2=k2, cov_norm=NP / (NP - 1.0), win_size=win_size,
        n_x_planes=len(x_planes), n_y_planes=len(y_planes),
        W=W, Ho=Ho, Hop=Hop)

    planes = x_planes + y_planes
    n_planes = len(planes)
    in_itemsize = jnp.dtype(x_planes[0].dtype).itemsize

    # Per-grid-step working-set estimate: pipelined image planes (x2 buffers),
    # single-buffered band matrices, and the in-kernel f32/bf16 temporaries.
    est = (n_planes * 2 * H * W * in_itemsize      # double-buffered inputs
           + (Hop * H + W * Wo) * 2                # bv, bh (bf16)
           + 2 * H * W * 4                         # x, y (f32)
           + 5 * H * W * 2                         # lane-stacked bf16 input
           + Hop * 5 * W * 4                       # vertical-pass f32 result
           + 5 * Hop * W * 2                       # sublane-restacked bf16
           + 5 * Hop * Wo * 4                      # horizontal-pass f32 result
           + 12 * Ho * Wo * 4)                     # SSIM elementwise temporaries
    vmem_limit = int(min(max(2 * est, 32 * 1024 * 1024), 64 * 1024 * 1024))

    def make_call(single_buffer_consts):
        const_kwargs = (dict(pipeline_mode=pl.Buffered(1))
                        if single_buffer_consts else {})
        in_specs = [pl.BlockSpec((1, H, W), lambda n, dr_ref: (n, 0, 0))
                    for _ in planes]
        in_specs += [
            pl.BlockSpec((Hop, H), lambda n, dr_ref: (0, 0), **const_kwargs),
            pl.BlockSpec((W, Wo), lambda n, dr_ref: (0, 0), **const_kwargs),
        ]
        return pl.pallas_call(
            kernel,
            out_shape=jax.ShapeDtypeStruct((N, 1, 1), jnp.float32),
            grid_spec=pltpu.PrefetchScalarGridSpec(
                num_scalar_prefetch=1,             # data_range lives in SMEM
                grid=(N,),
                in_specs=in_specs,
                out_specs=pl.BlockSpec((1, 1, 1), lambda n, dr_ref: (n, 0, 0)),
            ),
            compiler_params=pltpu.CompilerParams(
                dimension_semantics=("parallel",),  # images are independent
                vmem_limit_bytes=vmem_limit),
        )

    try:
        partial_sums = make_call(True)(dr, *planes, bv, bh)
    except Exception:
        # Fallback for JAX versions that reject single-buffered (Buffered(1))
        # constant operands; identical kernel, default double-buffering.
        partial_sums = make_call(False)(dr, *planes, bv, bh)

    # Final-mean normalization is a trace-time Python constant.
    inv_total = 1.0 / float(N * Ho * Wo)
    return (1.0 - jnp.sum(partial_sums) * inv_total).astype(jnp.float32)


def _ssim_loss_ref(X, Y, data_range, *, win_size=7, k1=0.01, k2=0.03):
    # Pure-JAX f32 reference mirroring the PyTorch module (for verification).
    if X.ndim == 5 and X.shape[-1] == 2:
        X = jnp.sqrt(X[..., 0] ** 2 + X[..., 1] ** 2)
    if Y.ndim == 5 and Y.shape[-1] == 2:
        Y = jnp.sqrt(Y[..., 0] ** 2 + Y[..., 1] ** 2)
    w = jnp.ones((1, 1, win_size, win_size), jnp.float32) / (win_size ** 2)
    NP = win_size ** 2
    cov_norm = NP / (NP - 1)
    X = jnp.abs(X).astype(jnp.float32)
    Y = jnp.abs(Y).astype(jnp.float32)
    dr = data_range[:, None, None, None].astype(jnp.float32)
    C1 = (k1 * dr) ** 2
    C2 = (k2 * dr) ** 2
    conv = lambda a: jax.lax.conv_general_dilated(
        a, w, (1, 1), "VALID", dimension_numbers=("NCHW", "OIHW", "NCHW"))
    ux, uy = conv(X), conv(Y)
    uxx, uyy, uxy = conv(X * X), conv(Y * Y), conv(X * Y)
    vx = cov_norm * (uxx - ux * ux)
    vy = cov_norm * (uyy - uy * uy)
    vxy = cov_norm * (uxy - ux * uy)
    A1, A2 = 2 * ux * uy + C1, 2 * vxy + C2
    B1, B2 = ux ** 2 + uy ** 2 + C1, vx + vy + C2
    S = A1 * A2 / (B1 * B2)
    return 1.0 - jnp.mean(S)


if __name__ == "__main__":
    key = jax.random.PRNGKey(0)
    k1_, k2_, k3_, k4_, k5_, k6_ = jax.random.split(key, 6)

    # Case 1: batch=2, 1 channel, 16x16, unit data_range.
    N, C, H, W = 2, 1, 16, 16
    X = jax.random.uniform(k1_, (N, C, H, W), dtype=jnp.float32)
    Y = jax.random.uniform(k2_, (N, C, H, W), dtype=jnp.float32)
    dr1 = jnp.ones((N,), jnp.float32)
    loss = jax.block_until_ready(ssim_loss(X, Y, dr1))
    ref = jax.block_until_ready(_ssim_loss_ref(X, Y, dr1))
    assert jnp.allclose(loss, ref, atol=1e-3, rtol=1e-3), (loss, ref)

    # Case 2: batch=3, 24x24, non-unit data_range.
    N2, H2, W2 = 3, 24, 24
    X2 = 2.5 * jax.random.uniform(k3_, (N2, 1, H2, W2), dtype=jnp.float32)
    Y2 = 2.5 * jax.random.uniform(k4_, (N2, 1, H2, W2), dtype=jnp.float32)
    dr2 = jnp.array([2.5, 1.7, 3.1], jnp.float32)
    loss2 = jax.block_until_ready(ssim_loss(X2, Y2, dr2))
    ref2 = jax.block_until_ready(_ssim_loss_ref(X2, Y2, dr2))
    assert jnp.allclose(loss2, ref2, atol=1e-3, rtol=1e-3), (loss2, ref2)

    # Case 3: complex-as-real-pair inputs (N, 1, H, W, 2); magnitude fused in-kernel.
    N3, H3, W3 = 2, 16, 16
    X3 = jax.random.normal(k5_, (N3, 1, H3, W3, 2), dtype=jnp.float32)
    Y3 = jax.random.normal(k6_, (N3, 1, H3, W3, 2), dtype=jnp.float32)
    dr3 = jnp.full((N3,), 1.4, jnp.float32)
    loss3 = jax.block_until_ready(ssim_loss(X3, Y3, dr3))
    ref3 = jax.block_until_ready(_ssim_loss_ref(X3, Y3, dr3))
    assert jnp.allclose(loss3, ref3, atol=1e-3, rtol=1e-3), (loss3, ref3)

    print("KERNEL_OK")
</pallas_src>

<mosaic_0001>
module attributes {stable_mosaic.version = 11 : i64} {
  func.func @_ssim_kernel(%arg0: i32, %arg1: memref<2xf32, #tpu.memory_space<smem>>, %arg2: memref<1x16x16xf32, #tpu.memory_space<vmem>>, %arg3: memref<1x16x16xf32, #tpu.memory_space<vmem>>, %arg4: memref<16x16xbf16, #tpu.memory_space<vmem>>, %arg5: memref<16x10xbf16, #tpu.memory_space<vmem>>, %arg6: memref<1x1x1xf32, #tpu.memory_space<vmem>>) attributes {dimension_semantics = [#tpu.dimension_semantics<parallel>], iteration_bounds = array<i64: 2>, scalar_prefetch = 1 : i64, scratch_operands = 0 : i64, tpu.core_type = #tpu.core_type<tc>, window_params = [{transform_indices = @transform_0, window_bounds = array<i64: 1, 16, 16>}, {transform_indices = @transform_1, window_bounds = array<i64: 1, 16, 16>}, {pipeline_mode = #tpu.pipeline_mode<synchronous>, transform_indices = @transform_2, window_bounds = array<i64: 16, 16>}, {pipeline_mode = #tpu.pipeline_mode<synchronous>, transform_indices = @transform_3, window_bounds = array<i64: 16, 10>}, {transform_indices = @transform_4, window_bounds = array<i64: 1, 1, 1>}]} {
    %c0 = arith.constant 0 : index
    %c0_0 = arith.constant 0 : index
    %c0_1 = arith.constant 0 : index
    %0 = vector.load %arg2[%c0, %c0_0, %c0_1] : memref<1x16x16xf32, #tpu.memory_space<vmem>>, vector<1x16x16xf32>
    %1 = vector.shape_cast %0 : vector<1x16x16xf32> to vector<16x16xf32>
    %2 = math.absf %1 : vector<16x16xf32>
    %c0_2 = arith.constant 0 : index
    %c0_3 = arith.constant 0 : index
    %c0_4 = arith.constant 0 : index
    %3 = vector.load %arg3[%c0_2, %c0_3, %c0_4] : memref<1x16x16xf32, #tpu.memory_space<vmem>>, vector<1x16x16xf32>
    %4 = vector.shape_cast %3 : vector<1x16x16xf32> to vector<16x16xf32>
    %5 = math.absf %4 : vector<16x16xf32>
    %6 = arith.index_cast %arg0 : i32 to index
    %7 = memref.load %arg1[%6] : memref<2xf32, #tpu.memory_space<smem>>
    %cst = arith.constant 0.00999999977 : f32
    %8 = arith.mulf %cst, %7 : f32
    %9 = arith.mulf %8, %8 : f32
    %cst_5 = arith.constant 3.000000e-02 : f32
    %10 = arith.mulf %cst_5, %7 : f32
    %11 = arith.mulf %10, %10 : f32
    %12 = vector.shape_cast %2 : vector<16x16xf32> to vector<1x16x16xf32>
    %cst_6 = arith.constant dense<0.000000e+00> : vector<1xf32>
    %13 = vector.multi_reduction <add>, %12, %cst_6 [1, 2] : vector<1x16x16xf32> to vector<1xf32>
    %14 = vector.shape_cast %13 : vector<1xf32> to vector<1x1x1xf32>
    %15 = vector.extract %14[0, 0, 0] : f32 from vector<1x1x1xf32>
    %16 = vector.broadcast %15 : f32 to vector<1x1xf32>
    %cst_7 = arith.constant 2.560000e+02 : f32
    %17 = vector.broadcast %cst_7 : f32 to vector<1x1xf32>
    %18 = arith.divf %16, %17 : vector<1x1xf32>
    %19 = vector.shape_cast %5 : vector<16x16xf32> to vector<1x16x16xf32>
    %cst_8 = arith.constant dense<0.000000e+00> : vector<1xf32>
    %20 = vector.multi_reduction <add>, %19, %cst_8 [1, 2] : vector<1x16x16xf32> to vector<1xf32>
    %21 = vector.shape_cast %20 : vector<1xf32> to vector<1x1x1xf32>
    %22 = vector.extract %21[0, 0, 0] : f32 from vector<1x1x1xf32>
    %23 = vector.broadcast %22 : f32 to vector<1x1xf32>
    %cst_9 = arith.constant 2.560000e+02 : f32
    %24 = vector.broadcast %cst_9 : f32 to vector<1x1xf32>
    %25 = arith.divf %23, %24 : vector<1x1xf32>
    %26 = vector.broadcast %18 : vector<1x1xf32> to vector<16x16xf32>
    %27 = arith.subf %2, %26 : vector<16x16xf32>
    %28 = vector.broadcast %25 : vector<1x1xf32> to vector<16x16xf32>
    %29 = arith.subf %5, %28 : vector<16x16xf32>
    %30 = arith.mulf %27, %27 : vector<16x16xf32>
    %31 = arith.mulf %29, %29 : vector<16x16xf32>
    %32 = arith.mulf %27, %29 : vector<16x16xf32>
    %33 = tpu.concatenate %27, %29, %30, %31, %32 in 1 : vector<16x16xf32>, vector<16x16xf32>, vector<16x16xf32>, vector<16x16xf32>, vector<16x16xf32> -> vector<16x80xf32>
    %34 = arith.truncf %33 : vector<16x80xf32> to vector<16x80xbf16>
    %c0_10 = arith.constant 0 : index
    %c0_11 = arith.constant 0 : index
    %35 = vector.load %arg4[%c0_10, %c0_11] : memref<16x16xbf16, #tpu.memory_space<vmem>>, vector<16x16xbf16>
    %c0_12 = arith.constant 0 : index
    %c0_13 = arith.constant 0 : index
    %36 = vector.load %arg5[%c0_12, %c0_13] : memref<16x10xbf16, #tpu.memory_space<vmem>>, vector<16x10xbf16>
    %cst_14 = arith.constant dense<0.000000e+00> : vector<16x80xf32>
    %37 = tpu.matmul %35, %34, %cst_14 {dimension_numbers = #tpu.dot_dimension_numbers<[1], [0], [0], [1], [0, 0, 1, 1], [], []>} : vector<16x16xbf16>, vector<16x80xbf16>, vector<16x80xf32> -> vector<16x80xf32>
    %38 = vector.extract_strided_slice %37 {offsets = [0, 0], sizes = [16, 16], strides = [1, 1]} : vector<16x80xf32> to vector<16x16xf32>
    %39 = vector.extract_strided_slice %37 {offsets = [0, 16], sizes = [16, 16], strides = [1, 1]} : vector<16x80xf32> to vector<16x16xf32>
    %40 = vector.extract_strided_slice %37 {offsets = [0, 32], sizes = [16, 16], strides = [1, 1]} : vector<16x80xf32> to vector<16x16xf32>
    %41 = vector.extract_strided_slice %37 {offsets = [0, 48], sizes = [16, 16], strides = [1, 1]} : vector<16x80xf32> to vector<16x16xf32>
    %42 = vector.extract_strided_slice %37 {offsets = [0, 64], sizes = [16, 16], strides = [1, 1]} : vector<16x80xf32> to vector<16x16xf32>
    %43 = tpu.concatenate %38, %39, %40, %41, %42 in 0 : vector<16x16xf32>, vector<16x16xf32>, vector<16x16xf32>, vector<16x16xf32>, vector<16x16xf32> -> vector<80x16xf32>
    %44 = arith.truncf %43 : vector<80x16xf32> to vector<80x16xbf16>
    %cst_15 = arith.constant dense<0.000000e+00> : vector<80x10xf32>
    %45 = tpu.matmul %44, %36, %cst_15 {dimension_numbers = #tpu.dot_dimension_numbers<[1], [0], [0], [1], [0, 0, 1, 1], [], []>} : vector<80x16xbf16>, vector<16x10xbf16>, vector<80x10xf32> -> vector<80x10xf32>
    %cst_16 = arith.constant 0.0204081628 : f32
    %46 = vector.broadcast %cst_16 : f32 to vector<80x10xf32>
    %47 = arith.mulf %45, %46 : vector<80x10xf32>
    %48 = vector.extract_strided_slice %47 {offsets = [0, 0], sizes = [10, 10], strides = [1, 1]} : vector<80x10xf32> to vector<10x10xf32>
    %49 = vector.extract_strided_slice %47 {offsets = [16, 0], sizes = [10, 10], strides = [1, 1]} : vector<80x10xf32> to vector<10x10xf32>
    %50 = vector.extract_strided_slice %47 {offsets = [32, 0], sizes = [10, 10], strides = [1, 1]} : vector<80x10xf32> to vector<10x10xf32>
    %51 = vector.extract_strided_slice %47 {offsets = [48, 0], sizes = [10, 10], strides = [1, 1]} : vector<80x10xf32> to vector<10x10xf32>
    %52 = vector.extract_strided_slice %47 {offsets = [64, 0], sizes = [10, 10], strides = [1, 1]} : vector<80x10xf32> to vector<10x10xf32>
    %53 = vector.broadcast %18 : vector<1x1xf32> to vector<10x10xf32>
    %54 = arith.addf %48, %53 : vector<10x10xf32>
    %55 = vector.broadcast %25 : vector<1x1xf32> to vector<10x10xf32>
    %56 = arith.addf %49, %55 : vector<10x10xf32>
    %57 = arith.mulf %54, %54 : vector<10x10xf32>
    %58 = arith.mulf %56, %56 : vector<10x10xf32>
    %59 = arith.mulf %54, %56 : vector<10x10xf32>
    %cst_17 = arith.constant 2.000000e+00 : f32
    %60 = vector.broadcast %cst_17 : f32 to vector<10x10xf32>
    %61 = arith.mulf %60, %59 : vector<10x10xf32>
    %62 = vector.broadcast %9 : f32 to vector<10x10xf32>
    %63 = arith.addf %61, %62 : vector<10x10xf32>
    %64 = arith.addf %57, %58 : vector<10x10xf32>
    %65 = vector.broadcast %9 : f32 to vector<10x10xf32>
    %66 = arith.addf %64, %65 : vector<10x10xf32>
    %67 = arith.mulf %48, %49 : vector<10x10xf32>
    %68 = arith.subf %52, %67 : vector<10x10xf32>
    %cst_18 = arith.constant 2.04166675 : f32
    %69 = vector.broadcast %cst_18 : f32 to vector<10x10xf32>
    %70 = arith.mulf %69, %68 : vector<10x10xf32>
    %71 = vector.broadcast %11 : f32 to vector<10x10xf32>
    %72 = arith.addf %70, %71 : vector<10x10xf32>
    %73 = arith.addf %50, %51 : vector<10x10xf32>
    %74 = arith.mulf %48, %48 : vector<10x10xf32>
    %75 = arith.mulf %49, %49 : vector<10x10xf32>
    %76 = arith.addf %74, %75 : vector<10x10xf32>
    %77 = arith.subf %73, %76 : vector<10x10xf32>
    %cst_19 = arith.constant 1.02083337 : f32
    %78 = vector.broadcast %cst_19 : f32 to vector<10x10xf32>
    %79 = arith.mulf %78, %77 : vector<10x10xf32>
    %80 = vector.broadcast %11 : f32 to vector<10x10xf32>
    %81 = arith.addf %79, %80 : vector<10x10xf32>
    %82 = arith.mulf %66, %81 : vector<10x10xf32>
    %83 = tpu.reciprocal %82 {approx = true} : vector<10x10xf32> -> vector<10x10xf32>
    %84 = arith.mulf %82, %83 : vector<10x10xf32>
    %cst_20 = arith.constant 2.000000e+00 : f32
    %85 = vector.broadcast %cst_20 : f32 to vector<10x10xf32>
    %86 = arith.subf %85, %84 : vector<10x10xf32>
    %87 = arith.mulf %83, %86 : vector<10x10xf32>
    %88 = arith.mulf %63, %72 : vector<10x10xf32>
    %89 = arith.mulf %88, %87 : vector<10x10xf32>
    %90 = vector.shape_cast %89 : vector<10x10xf32> to vector<1x10x10xf32>
    %cst_21 = arith.constant dense<0.000000e+00> : vector<1xf32>
    %91 = vector.multi_reduction <add>, %90, %cst_21 [1, 2] : vector<1x10x10xf32> to vector<1xf32>
    %92 = vector.shape_cast %91 : vector<1xf32> to vector<1x1x1xf32>
    %93 = vector.extract %92[0, 0, 0] : f32 from vector<1x1x1xf32>
    %94 = vector.broadcast %93 : f32 to vector<1x1xf32>
    %c0_22 = arith.constant 0 : index
    %c0_23 = arith.constant 0 : index
    %c0_24 = arith.constant 0 : index
    %95 = vector.load %arg6[%c0_22, %c0_23, %c0_24] : memref<1x1x1xf32, #tpu.memory_space<vmem>>, vector<1x1x1xf32>
    %96 = vector.shape_cast %95 : vector<1x1x1xf32> to vector<1x1xf32>
    %97 = vector.shape_cast %94 : vector<1x1xf32> to vector<1x1x1xf32>
    tpu.vector_store %arg6[%c0_22, %c0_23, %c0_24], %97 {strides = array<i32>} : memref<1x1x1xf32, #tpu.memory_space<vmem>>, vector<1x1x1xf32>,
    return
  }
  func.func @transform_0(%arg0: i32, %arg1: memref<2xf32, #tpu.memory_space<smem>>) -> (i32, i32, i32) {
    %c0_i32 = arith.constant 0 : i32
    %c0_i32_0 = arith.constant 0 : i32
    %c0_i32_1 = arith.constant 0 : i32
    return %arg0, %c0_i32, %c0_i32_0 : i32, i32, i32
  }
  func.func @transform_1(%arg0: i32, %arg1: memref<2xf32, #tpu.memory_space<smem>>) -> (i32, i32, i32) {
    %c0_i32 = arith.constant 0 : i32
    %c0_i32_0 = arith.constant 0 : i32
    %c0_i32_1 = arith.constant 0 : i32
    return %arg0, %c0_i32, %c0_i32_0 : i32, i32, i32
  }
  func.func @transform_2(%arg0: i32, %arg1: memref<2xf32, #tpu.memory_space<smem>>) -> (i32, i32) {
    %c0_i32 = arith.constant 0 : i32
    %c0_i32_0 = arith.constant 0 : i32
    %c0_i32_1 = arith.constant 0 : i32
    return %c0_i32, %c0_i32_0 : i32, i32
  }
  func.func @transform_3(%arg0: i32, %arg1: memref<2xf32, #tpu.memory_space<smem>>) -> (i32, i32) {
    %c0_i32 = arith.constant 0 : i32
    %c0_i32_0 = arith.constant 0 : i32
    %c0_i32_1 = arith.constant 0 : i32
    return %c0_i32, %c0_i32_0 : i32, i32
  }
  func.func @transform_4(%arg0: i32, %arg1: memref<2xf32, #tpu.memory_space<smem>>) -> (i32, i32, i32) {
    %c0_i32 = arith.constant 0 : i32
    %c0_i32_0 = arith.constant 0 : i32
    %c0_i32_1 = arith.constant 0 : i32
    return %arg0, %c0_i32, %c0_i32_0 : i32, i32, i32
  }
}

module attributes {stable_mosaic.version = 11 : i64} {
  func.func @_ssim_kernel(%arg0: i32, %arg1: memref<2xf32, #tpu.memory_space<smem>>, %arg2: memref<1x16x16xf32, #tpu.memory_space<vmem>>, %arg3: memref<1x16x16xf32, #tpu.memory_space<vmem>>, %arg4: memref<16x16xbf16, #tpu.memory_space<vmem>>, %arg5: memref<16x10xbf16, #tpu.memory_space<vmem>>, %arg6: memref<1x1x1xf32, #tpu.memory_space<vmem>>) attributes {dimension_semantics = [#tpu.dimension_semantics<parallel>], iteration_bounds = array<i64: 2>, scalar_prefetch = 1 : i64, scratch_operands = 0 : i64, tpu.core_type = #tpu.core_type<tc>, window_params = [{transform_indices = @transform_0, window_bounds = array<i64: 1, 16, 16>}, {transform_indices = @transform_1, window_bounds = array<i64: 1, 16, 16>}, {pipeline_mode = #tpu.pipeline_mode<synchronous>, transform_indices = @transform_2, window_bounds = array<i64: 16, 16>}, {pipeline_mode = #tpu.pipeline_mode<synchronous>, transform_indices = @transform_3, window_bounds = array<i64: 16, 10>}, {transform_indices = @transform_4, window_bounds = array<i64: 1, 1, 1>}]} {
    %c0 = arith.constant 0 : index
    %c0_0 = arith.constant 0 : index
    %c0_1 = arith.constant 0 : index
    %0 = vector.load %arg2[%c0, %c0_0, %c0_1] : memref<1x16x16xf32, #tpu.memory_space<vmem>>, vector<1x16x16xf32>
    %1 = vector.shape_cast %0 : vector<1x16x16xf32> to vector<16x16xf32>
    %2 = math.absf %1 : vector<16x16xf32>
    %c0_2 = arith.constant 0 : index
    %c0_3 = arith.constant 0 : index
    %c0_4 = arith.constant 0 : index
    %3 = vector.load %arg3[%c0_2, %c0_3, %c0_4] : memref<1x16x16xf32, #tpu.memory_space<vmem>>, vector<1x16x16xf32>
    %4 = vector.shape_cast %3 : vector<1x16x16xf32> to vector<16x16xf32>
    %5 = math.absf %4 : vector<16x16xf32>
    %6 = arith.index_cast %arg0 : i32 to index
    %7 = memref.load %arg1[%6] : memref<2xf32, #tpu.memory_space<smem>>
    %cst = arith.constant 0.00999999977 : f32
    %8 = arith.mulf %cst, %7 : f32
    %9 = arith.mulf %8, %8 : f32
    %cst_5 = arith.constant 3.000000e-02 : f32
    %10 = arith.mulf %cst_5, %7 : f32
    %11 = arith.mulf %10, %10 : f32
    %12 = vector.shape_cast %2 : vector<16x16xf32> to vector<1x16x16xf32>
    %cst_6 = arith.constant dense<0.000000e+00> : vector<1xf32>
    %13 = vector.multi_reduction <add>, %12, %cst_6 [1, 2] : vector<1x16x16xf32> to vector<1xf32>
    %14 = vector.shape_cast %13 : vector<1xf32> to vector<1x1x1xf32>
    %15 = vector.extract %14[0, 0, 0] : f32 from vector<1x1x1xf32>
    %16 = vector.broadcast %15 : f32 to vector<1x1xf32>
    %cst_7 = arith.constant 2.560000e+02 : f32
    %17 = vector.broadcast %cst_7 : f32 to vector<1x1xf32>
    %18 = arith.divf %16, %17 : vector<1x1xf32>
    %19 = vector.shape_cast %5 : vector<16x16xf32> to vector<1x16x16xf32>
    %cst_8 = arith.constant dense<0.000000e+00> : vector<1xf32>
    %20 = vector.multi_reduction <add>, %19, %cst_8 [1, 2] : vector<1x16x16xf32> to vector<1xf32>
    %21 = vector.shape_cast %20 : vector<1xf32> to vector<1x1x1xf32>
    %22 = vector.extract %21[0, 0, 0] : f32 from vector<1x1x1xf32>
    %23 = vector.broadcast %22 : f32 to vector<1x1xf32>
    %cst_9 = arith.constant 2.560000e+02 : f32
    %24 = vector.broadcast %cst_9 : f32 to vector<1x1xf32>
    %25 = arith.divf %23, %24 : vector<1x1xf32>
    %26 = vector.broadcast %18 : vector<1x1xf32> to vector<16x16xf32>
    %27 = arith.subf %2, %26 : vector<16x16xf32>
    %28 = vector.broadcast %25 : vector<1x1xf32> to vector<16x16xf32>
    %29 = arith.subf %5, %28 : vector<16x16xf32>
    %30 = arith.mulf %27, %27 : vector<16x16xf32>
    %31 = arith.mulf %29, %29 : vector<16x16xf32>
    %32 = arith.mulf %27, %29 : vector<16x16xf32>
    %33 = tpu.concatenate %27, %29, %30, %31, %32 in 1 : vector<16x16xf32>, vector<16x16xf32>, vector<16x16xf32>, vector<16x16xf32>, vector<16x16xf32> -> vector<16x80xf32>
    %34 = arith.truncf %33 : vector<16x80xf32> to vector<16x80xbf16>
    %c0_10 = arith.constant 0 : index
    %c0_11 = arith.constant 0 : index
    %35 = vector.load %arg4[%c0_10, %c0_11] : memref<16x16xbf16, #tpu.memory_space<vmem>>, vector<16x16xbf16>
    %c0_12 = arith.constant 0 : index
    %c0_13 = arith.constant 0 : index
    %36 = vector.load %arg5[%c0_12, %c0_13] : memref<16x10xbf16, #tpu.memory_space<vmem>>, vector<16x10xbf16>
    %cst_14 = arith.constant dense<0.000000e+00> : vector<16x80xf32>
    %37 = tpu.matmul %35, %34, %cst_14 {dimension_numbers = #tpu.dot_dimension_numbers<[1], [0], [0], [1], [0, 0, 1, 1], [], []>} : vector<16x16xbf16>, vector<16x80xbf16>, vector<16x80xf32> -> vector<16x80xf32>
    %38 = vector.extract_strided_slice %37 {offsets = [0, 0], sizes = [16, 16], strides = [1, 1]} : vector<16x80xf32> to vector<16x16xf32>
    %39 = vector.extract_strided_slice %37 {offsets = [0, 16], sizes = [16, 16], strides = [1, 1]} : vector<16x80xf32> to vector<16x16xf32>
    %40 = vector.extract_strided_slice %37 {offsets = [0, 32], sizes = [16, 16], strides = [1, 1]} : vector<16x80xf32> to vector<16x16xf32>
    %41 = vector.extract_strided_slice %37 {offsets = [0, 48], sizes = [16, 16], strides = [1, 1]} : vector<16x80xf32> to vector<16x16xf32>
    %42 = vector.extract_strided_slice %37 {offsets = [0, 64], sizes = [16, 16], strides = [1, 1]} : vector<16x80xf32> to vector<16x16xf32>
    %43 = tpu.concatenate %38, %39, %40, %41, %42 in 0 : vector<16x16xf32>, vector<16x16xf32>, vector<16x16xf32>, vector<16x16xf32>, vector<16x16xf32> -> vector<80x16xf32>
    %44 = arith.truncf %43 : vector<80x16xf32> to vector<80x16xbf16>
    %cst_15 = arith.constant dense<0.000000e+00> : vector<80x10xf32>
    %45 = tpu.matmul %44, %36, %cst_15 {dimension_numbers = #tpu.dot_dimension_numbers<[1], [0], [0], [1], [0, 0, 1, 1], [], []>} : vector<80x16xbf16>, vector<16x10xbf16>, vector<80x10xf32> -> vector<80x10xf32>
    %cst_16 = arith.constant 0.0204081628 : f32
    %46 = vector.broadcast %cst_16 : f32 to vector<80x10xf32>
    %47 = arith.mulf %45, %46 : vector<80x10xf32>
    %48 = vector.extract_strided_slice %47 {offsets = [0, 0], sizes = [10, 10], strides = [1, 1]} : vector<80x10xf32> to vector<10x10xf32>
    %49 = vector.extract_strided_slice %47 {offsets = [16, 0], sizes = [10, 10], strides = [1, 1]} : vector<80x10xf32> to vector<10x10xf32>
    %50 = vector.extract_strided_slice %47 {offsets = [32, 0], sizes = [10, 10], strides = [1, 1]} : vector<80x10xf32> to vector<10x10xf32>
    %51 = vector.extract_strided_slice %47 {offsets = [48, 0], sizes = [10, 10], strides = [1, 1]} : vector<80x10xf32> to vector<10x10xf32>
    %52 = vector.extract_strided_slice %47 {offsets = [64, 0], sizes = [10, 10], strides = [1, 1]} : vector<80x10xf32> to vector<10x10xf32>
    %53 = vector.broadcast %18 : vector<1x1xf32> to vector<10x10xf32>
    %54 = arith.addf %48, %53 : vector<10x10xf32>
    %55 = vector.broadcast %25 : vector<1x1xf32> to vector<10x10xf32>
    %56 = arith.addf %49, %55 : vector<10x10xf32>
    %57 = arith.mulf %54, %54 : vector<10x10xf32>
    %58 = arith.mulf %56, %56 : vector<10x10xf32>
    %59 = arith.mulf %54, %56 : vector<10x10xf32>
    %cst_17 = arith.constant 2.000000e+00 : f32
    %60 = vector.broadcast %cst_17 : f32 to vector<10x10xf32>
    %61 = arith.mulf %60, %59 : vector<10x10xf32>
    %62 = vector.broadcast %9 : f32 to vector<10x10xf32>
    %63 = arith.addf %61, %62 : vector<10x10xf32>
    %64 = arith.addf %57, %58 : vector<10x10xf32>
    %65 = vector.broadcast %9 : f32 to vector<10x10xf32>
    %66 = arith.addf %64, %65 : vector<10x10xf32>
    %67 = arith.mulf %48, %49 : vector<10x10xf32>
    %68 = arith.subf %52, %67 : vector<10x10xf32>
    %cst_18 = arith.constant 2.04166675 : f32
    %69 = vector.broadcast %cst_18 : f32 to vector<10x10xf32>
    %70 = arith.mulf %69, %68 : vector<10x10xf32>
    %71 = vector.broadcast %11 : f32 to vector<10x10xf32>
    %72 = arith.addf %70, %71 : vector<10x10xf32>
    %73 = arith.addf %50, %51 : vector<10x10xf32>
    %74 = arith.mulf %48, %48 : vector<10x10xf32>
    %75 = arith.mulf %49, %49 : vector<10x10xf32>
    %76 = arith.addf %74, %75 : vector<10x10xf32>
    %77 = arith.subf %73, %76 : vector<10x10xf32>
    %cst_19 = arith.constant 1.02083337 : f32
    %78 = vector.broadcast %cst_19 : f32 to vector<10x10xf32>
    %79 = arith.mulf %78, %77 : vector<10x10xf32>
    %80 = vector.broadcast %11 : f32 to vector<10x10xf32>
    %81 = arith.addf %79, %80 : vector<10x10xf32>
    %82 = arith.mulf %66, %81 : vector<10x10xf32>
    %83 = tpu.reciprocal %82 {approx = true} : vector<10x10xf32> -> vector<10x10xf32>
    %84 = arith.mulf %82, %83 : vector<10x10xf32>
    %cst_20 = arith.constant 2.000000e+00 : f32
    %85 = vector.broadcast %cst_20 : f32 to vector<10x10xf32>
    %86 = arith.subf %85, %84 : vector<10x10xf32>
    %87 = arith.mulf %83, %86 : vector<10x10xf32>
    %88 = arith.mulf %63, %72 : vector<10x10xf32>
    %89 = arith.mulf %88, %87 : vector<10x10xf32>
    %90 = vector.shape_cast %89 : vector<10x10xf32> to vector<1x10x10xf32>
    %cst_21 = arith.constant dense<0.000000e+00> : vector<1xf32>
    %91 = vector.multi_reduction <add>, %90, %cst_21 [1, 2] : vector<1x10x10xf32> to vector<1xf32>
    %92 = vector.shape_cast %91 : vector<1xf32> to vector<1x1x1xf32>
    %93 = vector.extract %92[0, 0, 0] : f32 from vector<1x1x1xf32>
    %94 = vector.broadcast %93 : f32 to vector<1x1xf32>
    %c0_22 = arith.constant 0 : index
    %c0_23 = arith.constant 0 : index
    %c0_24 = arith.constant 0 : index
    %95 = vector.load %arg6[%c0_22, %c0_23, %c0_24] : memref<1x1x1xf32, #tpu.memory_space<vmem>>, vector<1x1x1xf32>
    %96 = vector.shape_cast %95 : vector<1x1x1xf32> to vector<1x1xf32>
    %97 = vector.shape_cast %94 : vector<1x1xf32> to vector<1x1x1xf32>
    tpu.vector_store %arg6[%c0_22, %c0_23, %c0_24], %97 {strides = array<i32>} : memref<1x1x1xf32, #tpu.memory_space<vmem>>, vector<1x1x1xf32>,
    return
  }
  func.func @transform_0(%arg0: i32, %arg1: memref<2xf32, #tpu.memory_space<smem>>) -> (i32, i32, i32) {
    %c0_i32 = arith.constant 0 : i32
    %c0_i32_0 = arith.constant 0 : i32
    %c0_i32_1 = arith.constant 0 : i32
    return %arg0, %c0_i32, %c0_i32_0 : i32, i32, i32
  }
  func.func @transform_1(%arg0: i32, %arg1: memref<2xf32, #tpu.memory_space<smem>>) -> (i32, i32, i32) {
    %c0_i32 = arith.constant 0 : i32
    %c0_i32_0 = arith.constant 0 : i32
    %c0_i32_1 = arith.constant 0 : i32
    return %arg0, %c0_i32, %c0_i32_0 : i32, i32, i32
  }
  func.func @transform_2(%arg0: i32, %arg1: memref<2xf32, #tpu.memory_space<smem>>) -> (i32, i32) {
    %c0_i32 = arith.constant 0 : i32
    %c0_i32_0 = arith.constant 0 : i32
    %c0_i32_1 = arith.constant 0 : i32
    return %c0_i32, %c0_i32_0 : i32, i32
  }
  func.func @transform_3(%arg0: i32, %arg1: memref<2xf32, #tpu.memory_space<smem>>) -> (i32, i32) {
    %c0_i32 = arith.constant 0 : i32
    %c0_i32_0 = arith.constant 0 : i32
    %c0_i32_1 = arith.constant 0 : i32
    return %c0_i32, %c0_i32_0 : i32, i32
  }
  func.func @transform_4(%arg0: i32, %arg1: memref<2xf32, #tpu.memory_space<smem>>) -> (i32, i32, i32) {
    %c0_i32 = arith.constant 0 : i32
    %c0_i32_0 = arith.constant 0 : i32
    %c0_i32_1 = arith.constant 0 : i32
    return %arg0, %c0_i32, %c0_i32_0 : i32, i32, i32
  }
}

</mosaic_0001>

<llo_original>
// kernel: tpu_custom_call.1
$region0: #{tpu_custom_call.1}
  #allocation0 [shape = 'u32[]', space=smem, size = 0x4, offset = 0x4, fixed_abs, tag = 'smem constant byte address 0x4 - core index']
  #allocation1 [shape = 'u32[144,128]{1,0:T(1,128)}', space=vmem, size = 0x12000, scoped, tag = 'internal scratch']
  #allocation2 [shape = 's32[1]{0}', space=sflag, size = 0x4, scoped, tag = 'scoped memory for tpu_custom_call.1']
  #allocation3 [shape = 'u8[512]{0}', space=smem, size = 0x200, scoped, tag = 'prefetched SMEM operand 0']
  %s0 = inlined_call_operand.hbm [shape: f32[2], index: 0, kind: input, shape index: {}]
  %s1 = inlined_call_operand.hbm [shape: f32[2,16,16], index: 1, kind: input, shape index: {}]
  %s2 = inlined_call_operand.hbm [shape: f32[2,16,16], index: 2, kind: input, shape index: {}]
  %s3 = inlined_call_operand.vmem [shape: bf16[16,16], index: 3, kind: input, shape index: {}]
  %s4 = inlined_call_operand.hbm [shape: bf16[16,10], index: 4, kind: input, shape index: {}]
  %s5 = inlined_call_operand.vmem [shape: f32[2,1,1], index: 5, kind: output, shape index: {}]
  %s6 = sld [smem:[#allocation0]]
  $region61: #{tpu_custom_call.1} parent=0
    _
  %s8 = ssub.s32 1, %s6
  %s9 = scalar_select 0, %s8, %s6
  %11 = dma.hbm_to_smem %s0, 16, [#allocation3], [#allocation2]
  %12 = dma.done [#allocation2], 16
  %13 = sfence
  $region1: #{tpu_custom_call.1} parent=0
    #allocation4 [shape = 'u8[16384]{0}', space=vmem, size = 0x4000, scoped, tag = 'input window, operand 1']
    #allocation5 [shape = 's32[2]{0}', space=sflag, size = 0x8, scoped, tag = 'scoped memory for tpu_custom_call.1']
    #allocation6 [shape = 'u8[16384]{0}', space=vmem, size = 0x4000, scoped, tag = 'input window, operand 2']
    #allocation7 [shape = 's32[2]{0}', space=sflag, size = 0x8, scoped, tag = 'scoped memory for tpu_custom_call.1']
    #allocation8 [shape = 'u8[4096]{0}', space=vmem, size = 0x1000, scoped, tag = 'input window, operand 4, single buffered']
    %14 = vsyncpa [#allocation5], 0
    %s15 = scalar_lea.sflag [#allocation5], 1
    %16 = vsyncpa %s15, 0
    %17 = vsyncpa [#allocation7], 0
    %s18 = scalar_lea.sflag [#allocation7], 1
    %19 = vsyncpa %s18, 0
    loop: start=0, step=1, limit=4
    $region2: #{tpu_custom_call.1} parent=1 // loop_pre_header
      _
    $region3: #{tpu_custom_call.1} parent=1 // loop_header
      %s21 = sphi 0, %s25
      %p22 = scmp.ge.s32.totalorder %s21, 4
      %s31 = sphi 0, %s33
      %s34 = sphi 0, %s31
      %s35 = sphi 0, %s34
      %s51 = sphi 0, %s35
      %s57 = sphi 0, %s59
      %s60 = sphi 0, %s57
      %s61 = sphi 0, %s60
      %s77 = sphi 0, %s61
      %s81 = sphi 0, %s81
      %s83 = sphi 0, %s81
      %s84 = sphi 0, %s83
      %s98 = sphi 0, %s84
      %s102 = sphi 0, %s102
      %s104 = sphi 0, %s102
      %s105 = sphi 0, %s104
      %s119 = sphi 0, %s105
      %s125 = sphi 0, %s127
      %s128 = sphi 0, %s125
      %s129 = sphi 0, %s128
      %s145 = sphi 0, %s129
    $region4: #{tpu_custom_call.1} parent=1 // loop_header_branch
      %24 = sbr.rel (%p22) target = $region8
    $region5: #{tpu_custom_call.1} parent=1 // loop_body
      %s26 = ssub.s32 %s21, 1
      %s27 = ssub.s32 %s21, 2
      %s28 = sadd.s32 %s21, 1
      %s29 = ssub.s32 %s21, %s28
      %p30 = scmp.eq.s32.totalorder %s29, 0
      %s32 = sadd.s32 %s31, 1
      %s33 = scalar_select %p30, %s31, %s32
      %p36 = pneg %p30
      %p37 = scmp.eq.s32.totalorder %s21, 1
      %p38 = por %p36, %p37
      %p39 = scmp.ne.s32.totalorder %s31, %s34
      %p40 = scmp.eq.s32.totalorder %s21, 0
      %p41 = por %p39, %p40
      %p42 = scmp.ne.s32.totalorder %s31, %s34
      %p43 = scmp.eq.s32.totalorder %s26, 1
      %p44 = por %p42, %p43
      %p45 = scmp.ne.s32.totalorder %s34, %s35
      %p46 = scmp.eq.s32.totalorder %s26, 0
      %p47 = por %p45, %p46
      %p48 = scmp.ne.s32.totalorder %s34, %s35
      %p49 = scmp.eq.s32.totalorder %s27, 1
      %p50 = por %p48, %p49
      %p52 = scmp.ne.s32.totalorder %s35, %s51
      %p53 = scmp.eq.s32.totalorder %s27, 0
      %p54 = por %p52, %p53
      %s55 = ssub.s32 %s21, %s28
      %p56 = scmp.eq.s32.totalorder %s55, 0
      %s58 = sadd.s32 %s57, 1
      %s59 = scalar_select %p56, %s57, %s58
      %p62 = pneg %p56
      %p63 = scmp.eq.s32.totalorder %s21, 1
      %p64 = por %p62, %p63
      %p65 = scmp.ne.s32.totalorder %s57, %s60
      %p66 = scmp.eq.s32.totalorder %s21, 0
      %p67 = por %p65, %p66
      %p68 = scmp.ne.s32.totalorder %s57, %s60
      %p69 = scmp.eq.s32.totalorder %s26, 1
      %p70 = por %p68, %p69
      %p71 = scmp.ne.s32.totalorder %s60, %s61
      %p72 = scmp.eq.s32.totalorder %s26, 0
      %p73 = por %p71, %p72
      %p74 = scmp.ne.s32.totalorder %s60, %s61
      %p75 = scmp.eq.s32.totalorder %s27, 1
      %p76 = por %p74, %p75
      %p78 = scmp.ne.s32.totalorder %s61, %s77
      %p79 = scmp.eq.s32.totalorder %s27, 0
      %p80 = por %p78, %p79
      %s82 = sadd.s32 %s81, 1
      %p85 = scmp.eq.s32.totalorder %s21, 1
      %p86 = scmp.ne.s32.totalorder %s81, %s83
      %p87 = scmp.eq.s32.totalorder %s21, 0
      %p88 = por %p86, %p87
      %p89 = scmp.ne.s32.totalorder %s81, %s83
      %p90 = scmp.eq.s32.totalorder %s26, 1
      %p91 = por %p89, %p90
      %p92 = scmp.ne.s32.totalorder %s83, %s84
      %p93 = scmp.eq.s32.totalorder %s26, 0
      %p94 = por %p92, %p93
      %p95 = scmp.ne.s32.totalorder %s83, %s84
      %p96 = scmp.eq.s32.totalorder %s27, 1
      %p97 = por %p95, %p96
      %p99 = scmp.ne.s32.totalorder %s84, %s98
      %p100 = scmp.eq.s32.totalorder %s27, 0
      %p101 = por %p99, %p100
      %s103 = sadd.s32 %s102, 1
      %p106 = scmp.eq.s32.totalorder %s21, 1
      %p107 = scmp.ne.s32.totalorder %s102, %s104
      %p108 = scmp.eq.s32.totalorder %s21, 0
      %p109 = por %p107, %p108
      %p110 = scmp.ne.s32.totalorder %s102, %s104
      %p111 = scmp.eq.s32.totalorder %s26, 1
      %p112 = por %p110, %p111
      %p113 = scmp.ne.s32.totalorder %s104, %s105
      %p114 = scmp.eq.s32.totalorder %s26, 0
      %p115 = por %p113, %p114
      %p116 = scmp.ne.s32.totalorder %s104, %s105
      %p117 = scmp.eq.s32.totalorder %s27, 1
      %p118 = por %p116, %p117
      %p120 = scmp.ne.s32.totalorder %s105, %s119
      %p121 = scmp.eq.s32.totalorder %s27, 0
      %p122 = por %p120, %p121
      %s123 = ssub.s32 %s21, %s28
      %p124 = scmp.eq.s32.totalorder %s123, 0
      %s126 = sadd.s32 %s125, 1
      %s127 = scalar_select %p124, %s125, %s126
      %p130 = pneg %p124
      %p131 = scmp.eq.s32.totalorder %s21, 1
      %p132 = por %p130, %p131
      %p133 = scmp.ne.s32.totalorder %s125, %s128
      %p134 = scmp.eq.s32.totalorder %s21, 0
      %p135 = por %p133, %p134
      %p136 = scmp.ne.s32.totalorder %s125, %s128
      %p137 = scmp.eq.s32.totalorder %s26, 1
      %p138 = por %p136, %p137
      %p139 = scmp.ne.s32.totalorder %s128, %s129
      %p140 = scmp.eq.s32.totalorder %s26, 0
      %p141 = por %p139, %p140
      %p142 = scmp.ne.s32.totalorder %s128, %s129
      %p143 = scmp.eq.s32.totalorder %s27, 1
      %p144 = por %p142, %p143
      %p146 = scmp.ne.s32.totalorder %s129, %s145
      %p147 = scmp.eq.s32.totalorder %s27, 0
      %p148 = por %p146, %p147
      %p149 = scmp.le.s32.totalorder 1, %s21
      %p150 = scmp.lt.s32.totalorder %s21, 3
      %p151 = pnand %p149, %p150
      %p152 = pneg %p151
      // Predicated region
      $region9: #{tpu_custom_call.1} parent=5 // pred_check
        _
      $region10: #{tpu_custom_call.1} parent=5 // pred_check_branch
        %154 = sbr.rel (%p151) target = $region12
      $region11: #{tpu_custom_call.1} parent=5 // pred_region
        %s155 = ssub.s32 %s21, 1
        // Predicated region
        $region13: #{tpu_custom_call.1} parent=11 // pred_check
          %p156 = pneg %p94
        $region14: #{tpu_custom_call.1} parent=11 // pred_check_branch
          %158 = sbr.rel (%p156) target = $region16
        $region15: #{tpu_custom_call.1} parent=11 // pred_region
          _
        $region16: #{tpu_custom_call.1} parent=11 // pred_fallthru
          _
        // Predicated region
        $region17: #{tpu_custom_call.1} parent=11 // pred_check
          %p159 = pneg %p115
        $region18: #{tpu_custom_call.1} parent=11 // pred_check_branch
          %161 = sbr.rel (%p159) target = $region20
        $region19: #{tpu_custom_call.1} parent=11 // pred_region
          %s163 = ssub.s32 128, 128
          %164 = vsyncadd [#allocation7], %s163
          %s165 = sshll.u32 [#allocation8], 4
          %s166 = int_to_ptr.vmem [resolvable:$true] %s165
          %171 = dma.hbm_to_vmem [thread:$0]  %s4, 128, %s166, [#allocation7], 64, 64, 4
        $region20: #{tpu_custom_call.1} parent=11 // pred_fallthru
          _
      $region12: #{tpu_custom_call.1} parent=5 // pred_fallthru
        _
      %p172 = scmp.lt.s32.totalorder %s21, 2
      // Predicated region
      $region21: #{tpu_custom_call.1} parent=5 // pred_check
        %p173 = pneg %p172
      $region22: #{tpu_custom_call.1} parent=5 // pred_check_branch
        %175 = sbr.rel (%p173) target = $region24
      $region23: #{tpu_custom_call.1} parent=5 // pred_region
        // Predicated region
        $region25: #{tpu_custom_call.1} parent=23 // pred_check
          %p176 = pneg %p41
        $region26: #{tpu_custom_call.1} parent=23 // pred_check_branch
          %178 = sbr.rel (%p176) target = $region28
        $region27: #{tpu_custom_call.1} parent=23 // pred_region
          %s179 = sand.u32 %s31, 1
          %s180 = scalar_lea.sflag [#allocation5], %s179
          %s181 = sand.u32 %s31, 1
          %s182 = smul.addr %s181, 16
          %s183 = scalar_lea.vmem [#allocation4], %s182
          %s185 = ssub.s32 256, 256
          %186 = vsyncadd %s180, %s185
          %s187 = smul.addr %s21, 2
          %s188 = smul.addr %s187, 128
          %s189 = scalar_lea.hbm %s1, %s188
          %s190 = sshll.u32 %s183, 4
          %s191 = int_to_ptr.vmem [resolvable:$true] %s190
          %196 = dma.hbm_to_vmem [thread:$0]  %s189, 256, %s191, %s180, 128, 128, 8
        $region28: #{tpu_custom_call.1} parent=23 // pred_fallthru
          _
        // Predicated region
        $region29: #{tpu_custom_call.1} parent=23 // pred_check
          %p197 = pneg %p67
        $region30: #{tpu_custom_call.1} parent=23 // pred_check_branch
          %199 = sbr.rel (%p197) target = $region32
        $region31: #{tpu_custom_call.1} parent=23 // pred_region
          %s200 = sand.u32 %s21, 1
          %s201 = scalar_lea.sflag [#allocation7], %s200
          %s202 = sand.u32 %s57, 1
          %s203 = smul.addr %s202, 16
          %s204 = scalar_lea.vmem [#allocation6], %s203
          %s206 = ssub.s32 256, 256
          %207 = vsyncadd %s201, %s206
          %s208 = smul.addr %s21, 2
          %s209 = smul.addr %s208, 128
          %s210 = scalar_lea.hbm %s2, %s209
          %s211 = sshll.u32 %s204, 4
          %s212 = int_to_ptr.vmem [resolvable:$true] %s211
          %217 = dma.hbm_to_vmem [thread:$0]  %s210, 256, %s212, %s201, 128, 128, 8
        $region32: #{tpu_custom_call.1} parent=23 // pred_fallthru
          _
      $region24: #{tpu_custom_call.1} parent=5 // pred_fallthru
        _
      %p218 = scmp.le.s32.totalorder 1, %s21
      %p219 = scmp.lt.s32.totalorder %s21, 3
      %p220 = pnand %p218, %p219
      %p221 = pneg %p220
      // Predicated region
      $region33: #{tpu_custom_call.1} parent=5 // pred_check
        _
      $region34: #{tpu_custom_call.1} parent=5 // pred_check_branch
        %223 = sbr.rel (%p220) target = $region36
      $region35: #{tpu_custom_call.1} parent=5 // pred_region
        %s224 = ssub.s32 %s21, 1
        %s225 = sand.u32 %s34, 1
        %s226 = scalar_lea.sflag [#allocation5], %s225
        %s227 = sand.u32 %s34, 1
        %s228 = smul.addr %s227, 16
        %s229 = scalar_lea.vmem [#allocation4], %s228
        // Predicated region
        $region37: #{tpu_custom_call.1} parent=35 // pred_check
          %p230 = pneg %p47
        $region38: #{tpu_custom_call.1} parent=35 // pred_check_branch
          %232 = sbr.rel (%p230) target = $region40
        $region39: #{tpu_custom_call.1} parent=35 // pred_region
          %233 = dma.done %s226, 256
        $region40: #{tpu_custom_call.1} parent=35 // pred_fallthru
          _
        %s234 = sand.u32 %s26, 1
        %s235 = scalar_lea.sflag [#allocation7], %s234
        %s236 = sand.u32 %s60, 1
        %s237 = smul.addr %s236, 16
        %s238 = scalar_lea.vmem [#allocation6], %s237
        // Predicated region
        $region41: #{tpu_custom_call.1} parent=35 // pred_check
          %p239 = pneg %p73
        $region42: #{tpu_custom_call.1} parent=35 // pred_check_branch
          %241 = sbr.rel (%p239) target = $region44
        $region43: #{tpu_custom_call.1} parent=35 // pred_region
          %242 = dma.done %s235, 256
        $region44: #{tpu_custom_call.1} parent=35 // pred_fallthru
          _
        // Predicated region
        $region45: #{tpu_custom_call.1} parent=35 // pred_check
          %p243 = pneg %p115
        $region46: #{tpu_custom_call.1} parent=35 // pred_check_branch
          %245 = sbr.rel (%p243) target = $region48
        $region47: #{tpu_custom_call.1} parent=35 // pred_region
          %246 = dma.done [#allocation7], 128
        $region48: #{tpu_custom_call.1} parent=35 // pred_fallthru
          _
        %s247 = sand.u32 %s34, 1
        %s248 = scalar_lea.sflag [#allocation5], %s247
        %s249 = sand.u32 %s34, 1
        %s250 = smul.addr %s249, 16
        %s251 = scalar_lea.vmem [#allocation4], %s250
        %p252 = pneg %p47
        %p253 = pneg %p44
        %s254 = sand.u32 %s26, 1
        %s255 = scalar_lea.sflag [#allocation7], %s254
        %s256 = sand.u32 %s60, 1
        %s257 = smul.addr %s256, 16
        %s258 = scalar_lea.vmem [#allocation6], %s257
        %p259 = pneg %p73
        %p260 = pneg %p70
        %p261 = pneg %p94
        %p262 = pneg %p91
        %p263 = pneg %p115
        %p264 = pneg %p112
        %p265 = pneg %p141
        %p266 = pneg %p138
        %p267 = scmp.lt.s32.totalorder %s26, 1
        %s268 = scalar_select %p267, %s26, 1
        %s269 = scalar_lea.vmem %s5, %s268
        %p270 = scmp.lt.s32.totalorder %s26, 1
        %s271 = scalar_select %p270, %s26, 1
        %s272 = scalar_lea.vmem %s5, %s271
        %v274 = vld [vmem:[%s229] sm:$0xff]
        %v275 = vld [vmem:[%s229 + $0x8] sm:$0xff]
        %v276 = vand.u32 2147483647, %v274
        %v277 = vand.u32 2147483647, %v275
        %v278 = vld [vmem:[%s238] sm:$0xff]
        %v279 = vld [vmem:[%s238 + $0x8] sm:$0xff]
        %v280 = vand.u32 2147483647, %v278
        %v281 = vand.u32 2147483647, %v279
        %s282 = sld [smem:[#allocation3 + %s26]]
        %s283 = smul.f32 %s282, 0.01
        %s284 = smul.f32 %s283, %s283
        %s285 = smul.f32 %s282, 0.03
        %s286 = smul.f32 %s285, %s285
        %vm287 = vcmask 130048
        %v288 = vsel %vm287, %v276, 0.0
        %v289 = vsel %vm287, %v277, 0.0
        %v290 = vadd.f32 %v288, %v289
        %291 = vadd.xlane.f32.xlu0 %v290
        %v292 = vpop.xlane.xlu0 %291
        %v293 = vrot.slane %v292, 4
        %v294 = vadd.f32 %v292, %v293
        %v295 = vrot.slane %v294, 2
        %v296 = vadd.f32 %v294, %v295
        %v297 = vrot.slane %v296, 1
        %v298 = vadd.f32 %v296, %v297
        %s299 = vtos %v298
        %v300 = vstv %s299
        %v301 = vrcp.pop 256.0
        %v302 = vmul.f32 %v300, %v301
        %v303 = vsel %vm287, %v280, 0.0
        %v304 = vsel %vm287, %v281, 0.0
        %v305 = vadd.f32 %v303, %v304
        %306 = vadd.xlane.f32.xlu0 %v305
        %v307 = vpop.xlane.xlu0 %306
        %v308 = vrot.slane %v307, 4
        %v309 = vadd.f32 %v307, %v308
        %v310 = vrot.slane %v309, 2
        %v311 = vadd.f32 %v309, %v310
        %v312 = vrot.slane %v311, 1
        %v313 = vadd.f32 %v311, %v312
        %s314 = vtos %v313
        %v315 = vstv %s314
        %v316 = vmul.f32 %v315, %v301
        %v317 = vsub.f32 %v276, %v302
        %v318 = vsub.f32 %v277, %v302
        %v319 = vsub.f32 %v280, %v316
        %v320 = vsub.f32 %v281, %v316
        %v321 = vmul.f32 %v317, %v317
        %v322 = vmul.f32 %v318, %v318
        %v323 = vmul.f32 %v319, %v319
        %v324 = vmul.f32 %v320, %v320
        %v325 = vmul.f32 %v317, %v319
        %v326 = vmul.f32 %v318, %v320
        %329 = vrot.lane.b32.xlu0 %v319, 16
        %v330 = vpop.permute.xlu0 %329
        %331 = vrot.lane.b32.xlu0 %v320, 16
        %v332 = vpop.permute.xlu0 %331
        %337 = vrot.lane.b32.xlu0 %v321, 32
        %v338 = vpop.permute.xlu0 %337
        %339 = vrot.lane.b32.xlu0 %v322, 32
        %v340 = vpop.permute.xlu0 %339
        %345 = vrot.lane.b32.xlu0 %v323, 48
        %v346 = vpop.permute.xlu0 %345
        %347 = vrot.lane.b32.xlu0 %v324, 48
        %v348 = vpop.permute.xlu0 %347
        %353 = vrot.lane.b32.xlu0 %v325, 64
        %v354 = vpop.permute.xlu0 %353
        %355 = vrot.lane.b32.xlu0 %v326, 64
        %v356 = vpop.permute.xlu0 %355
        %v359 = vsel %vm287, %v317, %v330
        %v360 = vsel %vm287, %v318, %v332
        %vm361 = vcmask 261120
        %v362 = vsel %vm361, %v359, %v338
        %v363 = vsel %vm361, %v360, %v340
        %vm364 = vcmask 392192
        %v365 = vsel %vm364, %v362, %v346
        %v366 = vsel %vm364, %v363, %v348
        %vm367 = vcmask 523264
        %v368 = vsel %vm367, %v365, %v354
        %v369 = vsel %vm367, %v366, %v356
        %v370 = vpack.c.bf16 %v369, %v368
        %v371 = vld [vmem:[%s3] sm:$0xf]
        %v372 = vld [vmem:[%s3 + $0x4] sm:$0xf]
        %v373 = vld [vmem:[#allocation8] sm:$0xf]
        %v374 = vld [vmem:[#allocation8 + $0x4] sm:$0xf]
        %v377 = vunpack.c.l.b16 %v371
        %v378 = vunpack.c.l.b16 %v372
        %v379 = vpack.c.b16 %v378, %v377
        %v381 = vsel %vm287, %v379, 0
        %383 = vmatprep.subr.bf16.mxu0 0
        %384 = vmatpush1.bf16.msra.mxu0 %v370
        %385 = vmatprep.subr.bf16.mxu0 0
        %386 = vmatpush1.bf16.msra.mxu0 0
        %387 = vmatprep.subr.bf16.mxu0 0
        %388 = vmatpush1.bf16.msra.mxu0 0
        %389 = vmatprep.subr.bf16.mxu0 0
        %390 = vmatpush1.bf16.msra.mxu0 0
        %391 = vmatprep.subr.bf16.mxu0 0
        %392 = vmatpush1.bf16.msra.mxu0 0
        %393 = vmatprep.subr.bf16.mxu0 0
        %394 = vmatpush1.bf16.msra.mxu0 0
        %395 = vmatprep.subr.bf16.mxu0 0
        %396 = vmatpush1.bf16.msra.mxu0 0
        %397 = vmatprep.subr.bf16.mxu0 0
        %398 = vmatpush1.bf16.msra.mxu0 0
        %399 = vmatprep.subr.bf16.mxu0 0
        %400 = vmatpush1.bf16.msra.mxu0 0
        %401 = vmatprep.subr.bf16.mxu0 0
        %402 = vmatpush1.bf16.msra.mxu0 0
        %403 = vmatprep.subr.bf16.mxu0 0
        %404 = vmatpush1.bf16.msra.mxu0 0
        %405 = vmatprep.subr.bf16.mxu0 0
        %406 = vmatpush1.bf16.msra.mxu0 0
        %407 = vmatprep.subr.bf16.mxu0 0
        %408 = vmatpush1.bf16.msra.mxu0 0
        %409 = vmatprep.subr.bf16.mxu0 0
        %410 = vmatpush1.bf16.msra.mxu0 0
        %411 = vmatprep.subr.bf16.mxu0 0
        %412 = vmatpush1.bf16.msra.mxu0 0
        %413 = vmatprep.subr.bf16.mxu0 0
        %414 = vmatpush1.bf16.msra.mxu0 0
        %415 = vmatprep.mubr.bf16.mxu0 0
        %416 = vmatmul.mubr.bf16.gmra.mrb[0].mxu0 %v381
        %v417 = vpop.f32.mrb[0].mxu0
        %v418 = vadd.f32 0.0, %v417
        %v419 = vpop.f32.mrb[0].mxu0
        %v420 = vpop.f32.mrb[0].mxu0
        %v421 = vadd.f32 0.0, %v420
        %v422 = vpop.f32.mrb[0].mxu0
        %423 = vdwg.mxu0
        %426 = vrot.lane.b32.xlu0 %v418, 112
        %v427 = vpop.permute.xlu0 %426
        %428 = vrot.lane.b32.xlu0 %v421, 112
        %v429 = vpop.permute.xlu0 %428
        %432 = vrot.lane.b32.xlu0 %v418, 96
        %v433 = vpop.permute.xlu0 %432
        %434 = vrot.lane.b32.xlu0 %v421, 96
        %v435 = vpop.permute.xlu0 %434
        %438 = vrot.lane.b32.xlu0 %v418, 80
        %v439 = vpop.permute.xlu0 %438
        %440 = vrot.lane.b32.xlu0 %v421, 80
        %v441 = vpop.permute.xlu0 %440
        %444 = vrot.lane.b32.xlu0 %v418, 64
        %v445 = vpop.permute.xlu0 %444
        %446 = vrot.lane.b32.xlu0 %v421, 64
        %v447 = vpop.permute.xlu0 %446
        %v450 = vpack.c.bf16 %v421, %v418
        %v451 = vpack.c.bf16 %v429, %v427
        %v452 = vpack.c.bf16 %v435, %v433
        %v453 = vpack.c.bf16 %v441, %v439
        %v454 = vpack.c.bf16 %v447, %v445
        %v457 = vunpack.c.l.b16 %v373
        %v458 = vunpack.c.l.b16 %v374
        %v459 = vpack.c.b16 %v458, %v457
        %v462 = vsel %vm287, %v450, 0
        %v465 = vsel %vm287, %v451, 0
        %v468 = vsel %vm287, %v452, 0
        %v471 = vsel %vm287, %v453, 0
        %v474 = vsel %vm287, %v454, 0
        %476 = vmatprep.subr.bf16.mxu0 0
        %477 = vmatpush1.bf16.msra.mxu0 %v459
        %478 = vmatprep.subr.bf16.mxu0 0
        %479 = vmatpush1.bf16.msra.mxu0 0
        %480 = vmatprep.subr.bf16.mxu0 0
        %481 = vmatpush1.bf16.msra.mxu0 0
        %482 = vmatprep.subr.bf16.mxu0 0
        %483 = vmatpush1.bf16.msra.mxu0 0
        %484 = vmatprep.subr.bf16.mxu0 0
        %485 = vmatpush1.bf16.msra.mxu0 0
        %486 = vmatprep.subr.bf16.mxu0 0
        %487 = vmatpush1.bf16.msra.mxu0 0
        %488 = vmatprep.subr.bf16.mxu0 0
        %489 = vmatpush1.bf16.msra.mxu0 0
        %490 = vmatprep.subr.bf16.mxu0 0
        %491 = vmatpush1.bf16.msra.mxu0 0
        %492 = vmatprep.subr.bf16.mxu0 0
        %493 = vmatpush1.bf16.msra.mxu0 0
        %494 = vmatprep.subr.bf16.mxu0 0
        %495 = vmatpush1.bf16.msra.mxu0 0
        %496 = vmatprep.subr.bf16.mxu0 0
        %497 = vmatpush1.bf16.msra.mxu0 0
        %498 = vmatprep.subr.bf16.mxu0 0
        %499 = vmatpush1.bf16.msra.mxu0 0
        %500 = vmatprep.subr.bf16.mxu0 0
        %501 = vmatpush1.bf16.msra.mxu0 0
        %502 = vmatprep.subr.bf16.mxu0 0
        %503 = vmatpush1.bf16.msra.mxu0 0
        %504 = vmatprep.subr.bf16.mxu0 0
        %505 = vmatpush1.bf16.msra.mxu0 0
        %506 = vmatprep.subr.bf16.mxu0 0
        %507 = vmatpush1.bf16.msra.mxu0 0
        %508 = vmatprep.mubr.bf16.mxu0 0
        %509 = vmatmul.mubr.bf16.gmra.mrb[0].mxu0 %v462
        %v510 = vpop.f32.mrb[0].mxu0
        %v511 = vadd.f32 0.0, %v510
        %v512 = vpop.f32.mrb[0].mxu0
        %v513 = vpop.f32.mrb[0].mxu0
        %v514 = vadd.f32 0.0, %v513
        %v515 = vpop.f32.mrb[0].mxu0
        %516 = vmatprep.mubr.bf16.mxu0 0
        %517 = vmatmul.mubr.bf16.gmra.mrb[0].mxu0 %v465
        %v518 = vpop.f32.mrb[0].mxu0
        %v519 = vadd.f32 0.0, %v518
        %v520 = vpop.f32.mrb[0].mxu0
        %v521 = vpop.f32.mrb[0].mxu0
        %v522 = vadd.f32 0.0, %v521
        %v523 = vpop.f32.mrb[0].mxu0
        %524 = vmatprep.mubr.bf16.mxu0 0
        %525 = vmatmul.mubr.bf16.gmra.mrb[0].mxu0 %v468
        %v526 = vpop.f32.mrb[0].mxu0
        %v527 = vadd.f32 0.0, %v526
        %v528 = vpop.f32.mrb[0].mxu0
        %v529 = vpop.f32.mrb[0].mxu0
        %v530 = vadd.f32 0.0, %v529
        %v531 = vpop.f32.mrb[0].mxu0
        %532 = vmatprep.mubr.bf16.mxu0 0
        %533 = vmatmul.mubr.bf16.gmra.mrb[0].mxu0 %v471
        %v534 = vpop.f32.mrb[0].mxu0
        %v535 = vadd.f32 0.0, %v534
        %v536 = vpop.f32.mrb[0].mxu0
        %v537 = vpop.f32.mrb[0].mxu0
        %v538 = vadd.f32 0.0, %v537
        %v539 = vpop.f32.mrb[0].mxu0
        %540 = vmatprep.mubr.bf16.mxu0 0
        %541 = vmatmul.mubr.bf16.gmra.mrb[0].mxu0 %v474
        %v542 = vpop.f32.mrb[0].mxu0
        %v543 = vadd.f32 0.0, %v542
        %v544 = vpop.f32.mrb[0].mxu0
        %v545 = vpop.f32.mrb[0].mxu0
        %v546 = vadd.f32 0.0, %v545
        %v547 = vpop.f32.mrb[0].mxu0
        %548 = vdwg.mxu0
        %v549 = vmul.f32 %v511, 0.020408163
        %v550 = vmul.f32 %v514, 0.020408163
        %v551 = vmul.f32 %v519, 0.020408163
        %v552 = vmul.f32 %v522, 0.020408163
        %v553 = vmul.f32 %v527, 0.020408163
        %v554 = vmul.f32 %v530, 0.020408163
        %v555 = vmul.f32 %v535, 0.020408163
        %v556 = vmul.f32 %v538, 0.020408163
        %v557 = vmul.f32 %v543, 0.020408163
        %v558 = vmul.f32 %v546, 0.020408163
        %v559 = vadd.f32 %v549, %v302
        %v560 = vadd.f32 %v550, %v302
        %v561 = vadd.f32 %v551, %v316
        %v562 = vadd.f32 %v552, %v316
        %v563 = vmul.f32 %v559, %v559
        %v564 = vmul.f32 %v560, %v560
        %v565 = vmul.f32 %v561, %v561
        %v566 = vmul.f32 %v562, %v562
        %v567 = vmul.f32 %v559, %v561
        %v568 = vmul.f32 %v560, %v562
        %v569 = vmul.f32 %v567, 2.0
        %v570 = vmul.f32 %v568, 2.0
        %v571 = vstv %s284
        %v572 = vadd.f32 %v569, %v571
        %v573 = vadd.f32 %v570, %v571
        %v574 = vadd.f32 %v563, %v565
        %v575 = vadd.f32 %v564, %v566
        %v576 = vadd.f32 %v574, %v571
        %v577 = vadd.f32 %v575, %v571
        %v578 = vmul.f32 %v549, %v551
        %v579 = vmul.f32 %v550, %v552
        %v580 = vsub.f32 %v557, %v578
        %v581 = vsub.f32 %v558, %v579
        %v582 = vmul.f32 %v580, 2.0416667
        %v583 = vmul.f32 %v581, 2.0416667
        %v584 = vstv %s286
        %v585 = vadd.f32 %v582, %v584
        %v586 = vadd.f32 %v583, %v584
        %v587 = vadd.f32 %v553, %v555
        %v588 = vadd.f32 %v554, %v556
        %v589 = vmul.f32 %v549, %v549
        %v590 = vmul.f32 %v550, %v550
        %v591 = vmul.f32 %v551, %v551
        %v592 = vmul.f32 %v552, %v552
        %v593 = vadd.f32 %v589, %v591
        %v594 = vadd.f32 %v590, %v592
        %v595 = vsub.f32 %v587, %v593
        %v596 = vsub.f32 %v588, %v594
        %v597 = vmul.f32 %v595, 1.0208334
        %v598 = vmul.f32 %v596, 1.0208334
        %v599 = vadd.f32 %v597, %v584
        %v600 = vadd.f32 %v598, %v584
        %v601 = vmul.f32 %v576, %v599
        %v602 = vmul.f32 %v577, %v600
        %v603 = vrcp.pop %v601
        %v604 = vrcp.pop %v602
        %v605 = vmul.f32 %v601, %v603
        %v606 = vmul.f32 %v602, %v604
        %v607 = vsub.f32 2.0, %v605
        %v608 = vsub.f32 2.0, %v606
        %v609 = vmul.f32 %v603, %v607
        %v610 = vmul.f32 %v604, %v608
        %v611 = vmul.f32 %v572, %v585
        %v612 = vmul.f32 %v573, %v586
        %v613 = vmul.f32 %v611, %v609
        %v614 = vmul.f32 %v612, %v610
        %vm615 = vcmask 80896
        %v616 = vsel %vm615, %v613, 0.0
        %vm617 = vcmask 74752
        %v618 = vsel %vm617, %v614, 0.0
        %v619 = vadd.f32 %v616, %v618
        %620 = vadd.xlane.f32.xlu0 %v619
        %v621 = vpop.xlane.xlu0 %620
        %v622 = vrot.slane %v621, 4
        %v623 = vadd.f32 %v621, %v622
        %v624 = vrot.slane %v623, 2
        %v625 = vadd.f32 %v623, %v624
        %v626 = vrot.slane %v625, 1
        %v627 = vadd.f32 %v625, %v626
        %s628 = vtos %v627
        %v629 = vstv %s628
        %vm630 = vcmask 0
        %631 = vst.msk [vmem:[%s272] sm:$0x1] %vm630, %v629
        %p632 = scmp.lt.s32.totalorder %s26, 1
        %s633 = scalar_select %p632, %s26, 1
        %s634 = scalar_lea.vmem %s5, %s633
        // Predicated region
        $region49: #{tpu_custom_call.1} parent=35 // pred_check
          %p635 = pneg %p138
        $region50: #{tpu_custom_call.1} parent=35 // pred_check_branch
          %637 = sbr.rel (%p635) target = $region52
        $region51: #{tpu_custom_call.1} parent=35 // pred_region
          _
        $region52: #{tpu_custom_call.1} parent=35 // pred_fallthru
          _
      $region36: #{tpu_custom_call.1} parent=5 // pred_fallthru
        _
      %p638 = scmp.le.s32.totalorder 2, %s21
      // Predicated region
      $region53: #{tpu_custom_call.1} parent=5 // pred_check
        %p639 = pneg %p638
      $region54: #{tpu_custom_call.1} parent=5 // pred_check_branch
        %641 = sbr.rel (%p639) target = $region56
      $region55: #{tpu_custom_call.1} parent=5 // pred_region
        %s642 = ssub.s32 %s21, 2
        // Predicated region
        $region57: #{tpu_custom_call.1} parent=55 // pred_check
          %p643 = pneg %p144
        $region58: #{tpu_custom_call.1} parent=55 // pred_check_branch
          %645 = sbr.rel (%p643) target = $region60
        $region59: #{tpu_custom_call.1} parent=55 // pred_region
          %p646 = scmp.lt.s32.totalorder %s27, 1
          %s647 = scalar_select %p646, %s27, 1
          %s648 = scalar_lea.vmem %s5, %s647
        $region60: #{tpu_custom_call.1} parent=55 // pred_fallthru
          _
      $region56: #{tpu_custom_call.1} parent=5 // pred_fallthru
        _
    $region6: #{tpu_custom_call.1} parent=1 // loop_footer
      %s25 = sadd.s32 1, %s21
    $region7: #{tpu_custom_call.1} parent=1 // loop_footer_branch
      %20 = sbr.rel target = $region3
    $region8: #{tpu_custom_call.1} parent=1 // loop_exit
      _
    %649 = vsyncpa [#allocation5], 1
    %s650 = scalar_lea.sflag [#allocation5], 1
    %651 = vsyncpa %s650, 1
    %652 = vsyncpa [#allocation7], 1
    %s653 = scalar_lea.sflag [#allocation7], 1
    %654 = vsyncpa %s653, 1

// kernel: tpu_custom_call.1
$region0: #{tpu_custom_call.1}
  #allocation0 [shape = 'u32[]', space=smem, size = 0x4, offset = 0x4, fixed_abs, tag = 'smem constant byte address 0x4 - core index']
  #allocation1 [shape = 'u32[144,128]{1,0:T(1,128)}', space=vmem, size = 0x12000, scoped, tag = 'internal scratch']
  #allocation2 [shape = 's32[1]{0}', space=sflag, size = 0x4, scoped, tag = 'scoped memory for tpu_custom_call.1']
  #allocation3 [shape = 'u8[512]{0}', space=smem, size = 0x200, scoped, tag = 'prefetched SMEM operand 0']
  %s0 = inlined_call_operand.hbm [shape: f32[2], index: 0, kind: input, shape index: {}]
  %s1 = inlined_call_operand.hbm [shape: f32[2,16,16], index: 1, kind: input, shape index: {}]
  %s2 = inlined_call_operand.hbm [shape: f32[2,16,16], index: 2, kind: input, shape index: {}]
  %s3 = inlined_call_operand.vmem [shape: bf16[16,16], index: 3, kind: input, shape index: {}]
  %s4 = inlined_call_operand.hbm [shape: bf16[16,10], index: 4, kind: input, shape index: {}]
  %s5 = inlined_call_operand.vmem [shape: f32[2,1,1], index: 5, kind: output, shape index: {}]
  %s6 = sld [smem:[#allocation0]]
  $region61: #{tpu_custom_call.1} parent=0
    _
  %s8 = ssub.s32 1, %s6
  %s9 = scalar_select 0, %s8, %s6
  %11 = dma.hbm_to_smem %s0, 16, [#allocation3], [#allocation2]
  %12 = dma.done [#allocation2], 16
  %13 = sfence
  $region1: #{tpu_custom_call.1} parent=0
    #allocation4 [shape = 'u8[16384]{0}', space=vmem, size = 0x4000, scoped, tag = 'input window, operand 1']
    #allocation5 [shape = 's32[2]{0}', space=sflag, size = 0x8, scoped, tag = 'scoped memory for tpu_custom_call.1']
    #allocation6 [shape = 'u8[16384]{0}', space=vmem, size = 0x4000, scoped, tag = 'input window, operand 2']
    #allocation7 [shape = 's32[2]{0}', space=sflag, size = 0x8, scoped, tag = 'scoped memory for tpu_custom_call.1']
    #allocation8 [shape = 'u8[4096]{0}', space=vmem, size = 0x1000, scoped, tag = 'input window, operand 4, single buffered']
    %14 = vsyncpa [#allocation5], 0
    %s15 = scalar_lea.sflag [#allocation5], 1
    %16 = vsyncpa %s15, 0
    %17 = vsyncpa [#allocation7], 0
    %s18 = scalar_lea.sflag [#allocation7], 1
    %19 = vsyncpa %s18, 0
    loop: start=0, step=1, limit=4
    $region2: #{tpu_custom_call.1} parent=1 // loop_pre_header
      _
    $region3: #{tpu_custom_call.1} parent=1 // loop_header
      %s21 = sphi 0, %s25
      %p22 = scmp.ge.s32.totalorder %s21, 4
      %s31 = sphi 0, %s33
      %s34 = sphi 0, %s31
      %s35 = sphi 0, %s34
      %s51 = sphi 0, %s35
      %s57 = sphi 0, %s59
      %s60 = sphi 0, %s57
      %s61 = sphi 0, %s60
      %s77 = sphi 0, %s61
      %s81 = sphi 0, %s81
      %s83 = sphi 0, %s81
      %s84 = sphi 0, %s83
      %s98 = sphi 0, %s84
      %s102 = sphi 0, %s102
      %s104 = sphi 0, %s102
      %s105 = sphi 0, %s104
      %s119 = sphi 0, %s105
      %s125 = sphi 0, %s127
      %s128 = sphi 0, %s125
      %s129 = sphi 0, %s128
      %s145 = sphi 0, %s129
    $region4: #{tpu_custom_call.1} parent=1 // loop_header_branch
      %24 = sbr.rel (%p22) target = $region8
    $region5: #{tpu_custom_call.1} parent=1 // loop_body
      %s26 = ssub.s32 %s21, 1
      %s27 = ssub.s32 %s21, 2
      %s28 = sadd.s32 %s21, 1
      %s29 = ssub.s32 %s21, %s28
      %p30 = scmp.eq.s32.totalorder %s29, 0
      %s32 = sadd.s32 %s31, 1
      %s33 = scalar_select %p30, %s31, %s32
      %p36 = pneg %p30
      %p37 = scmp.eq.s32.totalorder %s21, 1
      %p38 = por %p36, %p37
      %p39 = scmp.ne.s32.totalorder %s31, %s34
      %p40 = scmp.eq.s32.totalorder %s21, 0
      %p41 = por %p39, %p40
      %p42 = scmp.ne.s32.totalorder %s31, %s34
      %p43 = scmp.eq.s32.totalorder %s26, 1
      %p44 = por %p42, %p43
      %p45 = scmp.ne.s32.totalorder %s34, %s35
      %p46 = scmp.eq.s32.totalorder %s26, 0
      %p47 = por %p45, %p46
      %p48 = scmp.ne.s32.totalorder %s34, %s35
      %p49 = scmp.eq.s32.totalorder %s27, 1
      %p50 = por %p48, %p49
      %p52 = scmp.ne.s32.totalorder %s35, %s51
      %p53 = scmp.eq.s32.totalorder %s27, 0
      %p54 = por %p52, %p53
      %s55 = ssub.s32 %s21, %s28
      %p56 = scmp.eq.s32.totalorder %s55, 0
      %s58 = sadd.s32 %s57, 1
      %s59 = scalar_select %p56, %s57, %s58
      %p62 = pneg %p56
      %p63 = scmp.eq.s32.totalorder %s21, 1
      %p64 = por %p62, %p63
      %p65 = scmp.ne.s32.totalorder %s57, %s60
      %p66 = scmp.eq.s32.totalorder %s21, 0
      %p67 = por %p65, %p66
      %p68 = scmp.ne.s32.totalorder %s57, %s60
      %p69 = scmp.eq.s32.totalorder %s26, 1
      %p70 = por %p68, %p69
      %p71 = scmp.ne.s32.totalorder %s60, %s61
      %p72 = scmp.eq.s32.totalorder %s26, 0
      %p73 = por %p71, %p72
      %p74 = scmp.ne.s32.totalorder %s60, %s61
      %p75 = scmp.eq.s32.totalorder %s27, 1
      %p76 = por %p74, %p75
      %p78 = scmp.ne.s32.totalorder %s61, %s77
      %p79 = scmp.eq.s32.totalorder %s27, 0
      %p80 = por %p78, %p79
      %s82 = sadd.s32 %s81, 1
      %p85 = scmp.eq.s32.totalorder %s21, 1
      %p86 = scmp.ne.s32.totalorder %s81, %s83
      %p87 = scmp.eq.s32.totalorder %s21, 0
      %p88 = por %p86, %p87
      %p89 = scmp.ne.s32.totalorder %s81, %s83
      %p90 = scmp.eq.s32.totalorder %s26, 1
      %p91 = por %p89, %p90
      %p92 = scmp.ne.s32.totalorder %s83, %s84
      %p93 = scmp.eq.s32.totalorder %s26, 0
      %p94 = por %p92, %p93
      %p95 = scmp.ne.s32.totalorder %s83, %s84
      %p96 = scmp.eq.s32.totalorder %s27, 1
      %p97 = por %p95, %p96
      %p99 = scmp.ne.s32.totalorder %s84, %s98
      %p100 = scmp.eq.s32.totalorder %s27, 0
      %p101 = por %p99, %p100
      %s103 = sadd.s32 %s102, 1
      %p106 = scmp.eq.s32.totalorder %s21, 1
      %p107 = scmp.ne.s32.totalorder %s102, %s104
      %p108 = scmp.eq.s32.totalorder %s21, 0
      %p109 = por %p107, %p108
      %p110 = scmp.ne.s32.totalorder %s102, %s104
      %p111 = scmp.eq.s32.totalorder %s26, 1
      %p112 = por %p110, %p111
      %p113 = scmp.ne.s32.totalorder %s104, %s105
      %p114 = scmp.eq.s32.totalorder %s26, 0
      %p115 = por %p113, %p114
      %p116 = scmp.ne.s32.totalorder %s104, %s105
      %p117 = scmp.eq.s32.totalorder %s27, 1
      %p118 = por %p116, %p117
      %p120 = scmp.ne.s32.totalorder %s105, %s119
      %p121 = scmp.eq.s32.totalorder %s27, 0
      %p122 = por %p120, %p121
      %s123 = ssub.s32 %s21, %s28
      %p124 = scmp.eq.s32.totalorder %s123, 0
      %s126 = sadd.s32 %s125, 1
      %s127 = scalar_select %p124, %s125, %s126
      %p130 = pneg %p124
      %p131 = scmp.eq.s32.totalorder %s21, 1
      %p132 = por %p130, %p131
      %p133 = scmp.ne.s32.totalorder %s125, %s128
      %p134 = scmp.eq.s32.totalorder %s21, 0
      %p135 = por %p133, %p134
      %p136 = scmp.ne.s32.totalorder %s125, %s128
      %p137 = scmp.eq.s32.totalorder %s26, 1
      %p138 = por %p136, %p137
      %p139 = scmp.ne.s32.totalorder %s128, %s129
      %p140 = scmp.eq.s32.totalorder %s26, 0
      %p141 = por %p139, %p140
      %p142 = scmp.ne.s32.totalorder %s128, %s129
      %p143 = scmp.eq.s32.totalorder %s27, 1
      %p144 = por %p142, %p143
      %p146 = scmp.ne.s32.totalorder %s129, %s145
      %p147 = scmp.eq.s32.totalorder %s27, 0
      %p148 = por %p146, %p147
      %p149 = scmp.le.s32.totalorder 1, %s21
      %p150 = scmp.lt.s32.totalorder %s21, 3
      %p151 = pnand %p149, %p150
      %p152 = pneg %p151
      // Predicated region
      $region9: #{tpu_custom_call.1} parent=5 // pred_check
        _
      $region10: #{tpu_custom_call.1} parent=5 // pred_check_branch
        %154 = sbr.rel (%p151) target = $region12
      $region11: #{tpu_custom_call.1} parent=5 // pred_region
        %s155 = ssub.s32 %s21, 1
        // Predicated region
        $region13: #{tpu_custom_call.1} parent=11 // pred_check
          %p156 = pneg %p94
        $region14: #{tpu_custom_call.1} parent=11 // pred_check_branch
          %158 = sbr.rel (%p156) target = $region16
        $region15: #{tpu_custom_call.1} parent=11 // pred_region
          _
        $region16: #{tpu_custom_call.1} parent=11 // pred_fallthru
          _
        // Predicated region
        $region17: #{tpu_custom_call.1} parent=11 // pred_check
          %p159 = pneg %p115
        $region18: #{tpu_custom_call.1} parent=11 // pred_check_branch
          %161 = sbr.rel (%p159) target = $region20
        $region19: #{tpu_custom_call.1} parent=11 // pred_region
          %s163 = ssub.s32 128, 128
          %164 = vsyncadd [#allocation7], %s163
          %s165 = sshll.u32 [#allocation8], 4
          %s166 = int_to_ptr.vmem [resolvable:$true] %s165
          %171 = dma.hbm_to_vmem [thread:$0]  %s4, 128, %s166, [#allocation7], 64, 64, 4
        $region20: #{tpu_custom_call.1} parent=11 // pred_fallthru
          _
      $region12: #{tpu_custom_call.1} parent=5 // pred_fallthru
        _
      %p172 = scmp.lt.s32.totalorder %s21, 2
      // Predicated region
      $region21: #{tpu_custom_call.1} parent=5 // pred_check
        %p173 = pneg %p172
      $region22: #{tpu_custom_call.1} parent=5 // pred_check_branch
        %175 = sbr.rel (%p173) target = $region24
      $region23: #{tpu_custom_call.1} parent=5 // pred_region
        // Predicated region
        $region25: #{tpu_custom_call.1} parent=23 // pred_check
          %p176 = pneg %p41
        $region26: #{tpu_custom_call.1} parent=23 // pred_check_branch
          %178 = sbr.rel (%p176) target = $region28
        $region27: #{tpu_custom_call.1} parent=23 // pred_region
          %s179 = sand.u32 %s31, 1
          %s180 = scalar_lea.sflag [#allocation5], %s179
          %s181 = sand.u32 %s31, 1
          %s182 = smul.addr %s181, 16
          %s183 = scalar_lea.vmem [#allocation4], %s182
          %s185 = ssub.s32 256, 256
          %186 = vsyncadd %s180, %s185
          %s187 = smul.addr %s21, 2
          %s188 = smul.addr %s187, 128
          %s189 = scalar_lea.hbm %s1, %s188
          %s190 = sshll.u32 %s183, 4
          %s191 = int_to_ptr.vmem [resolvable:$true] %s190
          %196 = dma.hbm_to_vmem [thread:$0]  %s189, 256, %s191, %s180, 128, 128, 8
        $region28: #{tpu_custom_call.1} parent=23 // pred_fallthru
          _
        // Predicated region
        $region29: #{tpu_custom_call.1} parent=23 // pred_check
          %p197 = pneg %p67
        $region30: #{tpu_custom_call.1} parent=23 // pred_check_branch
          %199 = sbr.rel (%p197) target = $region32
        $region31: #{tpu_custom_call.1} parent=23 // pred_region
          %s200 = sand.u32 %s21, 1
          %s201 = scalar_lea.sflag [#allocation7], %s200
          %s202 = sand.u32 %s57, 1
          %s203 = smul.addr %s202, 16
          %s204 = scalar_lea.vmem [#allocation6], %s203
          %s206 = ssub.s32 256, 256
          %207 = vsyncadd %s201, %s206
          %s208 = smul.addr %s21, 2
          %s209 = smul.addr %s208, 128
          %s210 = scalar_lea.hbm %s2, %s209
          %s211 = sshll.u32 %s204, 4
          %s212 = int_to_ptr.vmem [resolvable:$true] %s211
          %217 = dma.hbm_to_vmem [thread:$0]  %s210, 256, %s212, %s201, 128, 128, 8
        $region32: #{tpu_custom_call.1} parent=23 // pred_fallthru
          _
      $region24: #{tpu_custom_call.1} parent=5 // pred_fallthru
        _
      %p218 = scmp.le.s32.totalorder 1, %s21
      %p219 = scmp.lt.s32.totalorder %s21, 3
      %p220 = pnand %p218, %p219
      %p221 = pneg %p220
      // Predicated region
      $region33: #{tpu_custom_call.1} parent=5 // pred_check
        _
      $region34: #{tpu_custom_call.1} parent=5 // pred_check_branch
        %223 = sbr.rel (%p220) target = $region36
      $region35: #{tpu_custom_call.1} parent=5 // pred_region
        %s224 = ssub.s32 %s21, 1
        %s225 = sand.u32 %s34, 1
        %s226 = scalar_lea.sflag [#allocation5], %s225
        %s227 = sand.u32 %s34, 1
        %s228 = smul.addr %s227, 16
        %s229 = scalar_lea.vmem [#allocation4], %s228
        // Predicated region
        $region37: #{tpu_custom_call.1} parent=35 // pred_check
          %p230 = pneg %p47
        $region38: #{tpu_custom_call.1} parent=35 // pred_check_branch
          %232 = sbr.rel (%p230) target = $region40
        $region39: #{tpu_custom_call.1} parent=35 // pred_region
          %233 = dma.done %s226, 256
        $region40: #{tpu_custom_call.1} parent=35 // pred_fallthru
          _
        %s234 = sand.u32 %s26, 1
        %s235 = scalar_lea.sflag [#allocation7], %s234
        %s236 = sand.u32 %s60, 1
        %s237 = smul.addr %s236, 16
        %s238 = scalar_lea.vmem [#allocation6], %s237
        // Predicated region
        $region41: #{tpu_custom_call.1} parent=35 // pred_check
          %p239 = pneg %p73
        $region42: #{tpu_custom_call.1} parent=35 // pred_check_branch
          %241 = sbr.rel (%p239) target = $region44
        $region43: #{tpu_custom_call.1} parent=35 // pred_region
          %242 = dma.done %s235, 256
        $region44: #{tpu_custom_call.1} parent=35 // pred_fallthru
          _
        // Predicated region
        $region45: #{tpu_custom_call.1} parent=35 // pred_check
          %p243 = pneg %p115
        $region46: #{tpu_custom_call.1} parent=35 // pred_check_branch
          %245 = sbr.rel (%p243) target = $region48
        $region47: #{tpu_custom_call.1} parent=35 // pred_region
          %246 = dma.done [#allocation7], 128
        $region48: #{tpu_custom_call.1} parent=35 // pred_fallthru
          _
        %s247 = sand.u32 %s34, 1
        %s248 = scalar_lea.sflag [#allocation5], %s247
        %s249 = sand.u32 %s34, 1
        %s250 = smul.addr %s249, 16
        %s251 = scalar_lea.vmem [#allocation4], %s250
        %p252 = pneg %p47
        %p253 = pneg %p44
        %s254 = sand.u32 %s26, 1
        %s255 = scalar_lea.sflag [#allocation7], %s254
        %s256 = sand.u32 %s60, 1
        %s257 = smul.addr %s256, 16
        %s258 = scalar_lea.vmem [#allocation6], %s257
        %p259 = pneg %p73
        %p260 = pneg %p70
        %p261 = pneg %p94
        %p262 = pneg %p91
        %p263 = pneg %p115
        %p264 = pneg %p112
        %p265 = pneg %p141
        %p266 = pneg %p138
        %p267 = scmp.lt.s32.totalorder %s26, 1
        %s268 = scalar_select %p267, %s26, 1
        %s269 = scalar_lea.vmem %s5, %s268
        %p270 = scmp.lt.s32.totalorder %s26, 1
        %s271 = scalar_select %p270, %s26, 1
        %s272 = scalar_lea.vmem %s5, %s271
        %v274 = vld [vmem:[%s229] sm:$0xff]
        %v275 = vld [vmem:[%s229 + $0x8] sm:$0xff]
        %v276 = vand.u32 2147483647, %v274
        %v277 = vand.u32 2147483647, %v275
        %v278 = vld [vmem:[%s238] sm:$0xff]
        %v279 = vld [vmem:[%s238 + $0x8] sm:$0xff]
        %v280 = vand.u32 2147483647, %v278
        %v281 = vand.u32 2147483647, %v279
        %s282 = sld [smem:[#allocation3 + %s26]]
        %s283 = smul.f32 %s282, 0.01
        %s284 = smul.f32 %s283, %s283
        %s285 = smul.f32 %s282, 0.03
        %s286 = smul.f32 %s285, %s285
        %vm287 = vcmask 130048
        %v288 = vsel %vm287, %v276, 0.0
        %v289 = vsel %vm287, %v277, 0.0
        %v290 = vadd.f32 %v288, %v289
        %291 = vadd.xlane.f32.xlu0 %v290
        %v292 = vpop.xlane.xlu0 %291
        %v293 = vrot.slane %v292, 4
        %v294 = vadd.f32 %v292, %v293
        %v295 = vrot.slane %v294, 2
        %v296 = vadd.f32 %v294, %v295
        %v297 = vrot.slane %v296, 1
        %v298 = vadd.f32 %v296, %v297
        %s299 = vtos %v298
        %v300 = vstv %s299
        %v301 = vrcp.pop 256.0
        %v302 = vmul.f32 %v300, %v301
        %v303 = vsel %vm287, %v280, 0.0
        %v304 = vsel %vm287, %v281, 0.0
        %v305 = vadd.f32 %v303, %v304
        %306 = vadd.xlane.f32.xlu0 %v305
        %v307 = vpop.xlane.xlu0 %306
        %v308 = vrot.slane %v307, 4
        %v309 = vadd.f32 %v307, %v308
        %v310 = vrot.slane %v309, 2
        %v311 = vadd.f32 %v309, %v310
        %v312 = vrot.slane %v311, 1
        %v313 = vadd.f32 %v311, %v312
        %s314 = vtos %v313
        %v315 = vstv %s314
        %v316 = vmul.f32 %v315, %v301
        %v317 = vsub.f32 %v276, %v302
        %v318 = vsub.f32 %v277, %v302
        %v319 = vsub.f32 %v280, %v316
        %v320 = vsub.f32 %v281, %v316
        %v321 = vmul.f32 %v317, %v317
        %v322 = vmul.f32 %v318, %v318
        %v323 = vmul.f32 %v319, %v319
        %v324 = vmul.f32 %v320, %v320
        %v325 = vmul.f32 %v317, %v319
        %v326 = vmul.f32 %v318, %v320
        %329 = vrot.lane.b32.xlu0 %v319, 16
        %v330 = vpop.permute.xlu0 %329
        %331 = vrot.lane.b32.xlu0 %v320, 16
        %v332 = vpop.permute.xlu0 %331
        %337 = vrot.lane.b32.xlu0 %v321, 32
        %v338 = vpop.permute.xlu0 %337
        %339 = vrot.lane.b32.xlu0 %v322, 32
        %v340 = vpop.permute.xlu0 %339
        %345 = vrot.lane.b32.xlu0 %v323, 48
        %v346 = vpop.permute.xlu0 %345
        %347 = vrot.lane.b32.xlu0 %v324, 48
        %v348 = vpop.permute.xlu0 %347
        %353 = vrot.lane.b32.xlu0 %v325, 64
        %v354 = vpop.permute.xlu0 %353
        %355 = vrot.lane.b32.xlu0 %v326, 64
        %v356 = vpop.permute.xlu0 %355
        %v359 = vsel %vm287, %v317, %v330
        %v360 = vsel %vm287, %v318, %v332
        %vm361 = vcmask 261120
        %v362 = vsel %vm361, %v359, %v338
        %v363 = vsel %vm361, %v360, %v340
        %vm364 = vcmask 392192
        %v365 = vsel %vm364, %v362, %v346
        %v366 = vsel %vm364, %v363, %v348
        %vm367 = vcmask 523264
        %v368 = vsel %vm367, %v365, %v354
        %v369 = vsel %vm367, %v366, %v356
        %v370 = vpack.c.bf16 %v369, %v368
        %v371 = vld [vmem:[%s3] sm:$0xf]
        %v372 = vld [vmem:[%s3 + $0x4] sm:$0xf]
        %v373 = vld [vmem:[#allocation8] sm:$0xf]
        %v374 = vld [vmem:[#allocation8 + $0x4] sm:$0xf]
        %v377 = vunpack.c.l.b16 %v371
        %v378 = vunpack.c.l.b16 %v372
        %v379 = vpack.c.b16 %v378, %v377
        %v381 = vsel %vm287, %v379, 0
        %383 = vmatprep.subr.bf16.mxu0 0
        %384 = vmatpush1.bf16.msra.mxu0 %v370
        %385 = vmatprep.subr.bf16.mxu0 0
        %386 = vmatpush1.bf16.msra.mxu0 0
        %387 = vmatprep.subr.bf16.mxu0 0
        %388 = vmatpush1.bf16.msra.mxu0 0
        %389 = vmatprep.subr.bf16.mxu0 0
        %390 = vmatpush1.bf16.msra.mxu0 0
        %391 = vmatprep.subr.bf16.mxu0 0
        %392 = vmatpush1.bf16.msra.mxu0 0
        %393 = vmatprep.subr.bf16.mxu0 0
        %394 = vmatpush1.bf16.msra.mxu0 0
        %395 = vmatprep.subr.bf16.mxu0 0
        %396 = vmatpush1.bf16.msra.mxu0 0
        %397 = vmatprep.subr.bf16.mxu0 0
        %398 = vmatpush1.bf16.msra.mxu0 0
        %399 = vmatprep.subr.bf16.mxu0 0
        %400 = vmatpush1.bf16.msra.mxu0 0
        %401 = vmatprep.subr.bf16.mxu0 0
        %402 = vmatpush1.bf16.msra.mxu0 0
        %403 = vmatprep.subr.bf16.mxu0 0
        %404 = vmatpush1.bf16.msra.mxu0 0
        %405 = vmatprep.subr.bf16.mxu0 0
        %406 = vmatpush1.bf16.msra.mxu0 0
        %407 = vmatprep.subr.bf16.mxu0 0
        %408 = vmatpush1.bf16.msra.mxu0 0
        %409 = vmatprep.subr.bf16.mxu0 0
        %410 = vmatpush1.bf16.msra.mxu0 0
        %411 = vmatprep.subr.bf16.mxu0 0
        %412 = vmatpush1.bf16.msra.mxu0 0
        %413 = vmatprep.subr.bf16.mxu0 0
        %414 = vmatpush1.bf16.msra.mxu0 0
        %415 = vmatprep.mubr.bf16.mxu0 0
        %416 = vmatmul.mubr.bf16.gmra.mrb[0].mxu0 %v381
        %v417 = vpop.f32.mrb[0].mxu0
        %v418 = vadd.f32 0.0, %v417
        %v419 = vpop.f32.mrb[0].mxu0
        %v420 = vpop.f32.mrb[0].mxu0
        %v421 = vadd.f32 0.0, %v420
        %v422 = vpop.f32.mrb[0].mxu0
        %423 = vdwg.mxu0
        %426 = vrot.lane.b32.xlu0 %v418, 112
        %v427 = vpop.permute.xlu0 %426
        %428 = vrot.lane.b32.xlu0 %v421, 112
        %v429 = vpop.permute.xlu0 %428
        %432 = vrot.lane.b32.xlu0 %v418, 96
        %v433 = vpop.permute.xlu0 %432
        %434 = vrot.lane.b32.xlu0 %v421, 96
        %v435 = vpop.permute.xlu0 %434
        %438 = vrot.lane.b32.xlu0 %v418, 80
        %v439 = vpop.permute.xlu0 %438
        %440 = vrot.lane.b32.xlu0 %v421, 80
        %v441 = vpop.permute.xlu0 %440
        %444 = vrot.lane.b32.xlu0 %v418, 64
        %v445 = vpop.permute.xlu0 %444
        %446 = vrot.lane.b32.xlu0 %v421, 64
        %v447 = vpop.permute.xlu0 %446
        %v450 = vpack.c.bf16 %v421, %v418
        %v451 = vpack.c.bf16 %v429, %v427
        %v452 = vpack.c.bf16 %v435, %v433
        %v453 = vpack.c.bf16 %v441, %v439
        %v454 = vpack.c.bf16 %v447, %v445
        %v457 = vunpack.c.l.b16 %v373
        %v458 = vunpack.c.l.b16 %v374
        %v459 = vpack.c.b16 %v458, %v457
        %v462 = vsel %vm287, %v450, 0
        %v465 = vsel %vm287, %v451, 0
        %v468 = vsel %vm287, %v452, 0
        %v471 = vsel %vm287, %v453, 0
        %v474 = vsel %vm287, %v454, 0
        %476 = vmatprep.subr.bf16.mxu0 0
        %477 = vmatpush1.bf16.msra.mxu0 %v459
        %478 = vmatprep.subr.bf16.mxu0 0
        %479 = vmatpush1.bf16.msra.mxu0 0
        %480 = vmatprep.subr.bf16.mxu0 0
        %481 = vmatpush1.bf16.msra.mxu0 0
        %482 = vmatprep.subr.bf16.mxu0 0
        %483 = vmatpush1.bf16.msra.mxu0 0
        %484 = vmatprep.subr.bf16.mxu0 0
        %485 = vmatpush1.bf16.msra.mxu0 0
        %486 = vmatprep.subr.bf16.mxu0 0
        %487 = vmatpush1.bf16.msra.mxu0 0
        %488 = vmatprep.subr.bf16.mxu0 0
        %489 = vmatpush1.bf16.msra.mxu0 0
        %490 = vmatprep.subr.bf16.mxu0 0
        %491 = vmatpush1.bf16.msra.mxu0 0
        %492 = vmatprep.subr.bf16.mxu0 0
        %493 = vmatpush1.bf16.msra.mxu0 0
        %494 = vmatprep.subr.bf16.mxu0 0
        %495 = vmatpush1.bf16.msra.mxu0 0
        %496 = vmatprep.subr.bf16.mxu0 0
        %497 = vmatpush1.bf16.msra.mxu0 0
        %498 = vmatprep.subr.bf16.mxu0 0
        %499 = vmatpush1.bf16.msra.mxu0 0
        %500 = vmatprep.subr.bf16.mxu0 0
        %501 = vmatpush1.bf16.msra.mxu0 0
        %502 = vmatprep.subr.bf16.mxu0 0
        %503 = vmatpush1.bf16.msra.mxu0 0
        %504 = vmatprep.subr.bf16.mxu0 0
        %505 = vmatpush1.bf16.msra.mxu0 0
        %506 = vmatprep.subr.bf16.mxu0 0
        %507 = vmatpush1.bf16.msra.mxu0 0
        %508 = vmatprep.mubr.bf16.mxu0 0
        %509 = vmatmul.mubr.bf16.gmra.mrb[0].mxu0 %v462
        %v510 = vpop.f32.mrb[0].mxu0
        %v511 = vadd.f32 0.0, %v510
        %v512 = vpop.f32.mrb[0].mxu0
        %v513 = vpop.f32.mrb[0].mxu0
        %v514 = vadd.f32 0.0, %v513
        %v515 = vpop.f32.mrb[0].mxu0
        %516 = vmatprep.mubr.bf16.mxu0 0
        %517 = vmatmul.mubr.bf16.gmra.mrb[0].mxu0 %v465
        %v518 = vpop.f32.mrb[0].mxu0
        %v519 = vadd.f32 0.0, %v518
        %v520 = vpop.f32.mrb[0].mxu0
        %v521 = vpop.f32.mrb[0].mxu0
        %v522 = vadd.f32 0.0, %v521
        %v523 = vpop.f32.mrb[0].mxu0
        %524 = vmatprep.mubr.bf16.mxu0 0
        %525 = vmatmul.mubr.bf16.gmra.mrb[0].mxu0 %v468
        %v526 = vpop.f32.mrb[0].mxu0
        %v527 = vadd.f32 0.0, %v526
        %v528 = vpop.f32.mrb[0].mxu0
        %v529 = vpop.f32.mrb[0].mxu0
        %v530 = vadd.f32 0.0, %v529
        %v531 = vpop.f32.mrb[0].mxu0
        %532 = vmatprep.mubr.bf16.mxu0 0
        %533 = vmatmul.mubr.bf16.gmra.mrb[0].mxu0 %v471
        %v534 = vpop.f32.mrb[0].mxu0
        %v535 = vadd.f32 0.0, %v534
        %v536 = vpop.f32.mrb[0].mxu0
        %v537 = vpop.f32.mrb[0].mxu0
        %v538 = vadd.f32 0.0, %v537
        %v539 = vpop.f32.mrb[0].mxu0
        %540 = vmatprep.mubr.bf16.mxu0 0
        %541 = vmatmul.mubr.bf16.gmra.mrb[0].mxu0 %v474
        %v542 = vpop.f32.mrb[0].mxu0
        %v543 = vadd.f32 0.0, %v542
        %v544 = vpop.f32.mrb[0].mxu0
        %v545 = vpop.f32.mrb[0].mxu0
        %v546 = vadd.f32 0.0, %v545
        %v547 = vpop.f32.mrb[0].mxu0
        %548 = vdwg.mxu0
        %v549 = vmul.f32 %v511, 0.020408163
        %v550 = vmul.f32 %v514, 0.020408163
        %v551 = vmul.f32 %v519, 0.020408163
        %v552 = vmul.f32 %v522, 0.020408163
        %v553 = vmul.f32 %v527, 0.020408163
        %v554 = vmul.f32 %v530, 0.020408163
        %v555 = vmul.f32 %v535, 0.020408163
        %v556 = vmul.f32 %v538, 0.020408163
        %v557 = vmul.f32 %v543, 0.020408163
        %v558 = vmul.f32 %v546, 0.020408163
        %v559 = vadd.f32 %v549, %v302
        %v560 = vadd.f32 %v550, %v302
        %v561 = vadd.f32 %v551, %v316
        %v562 = vadd.f32 %v552, %v316
        %v563 = vmul.f32 %v559, %v559
        %v564 = vmul.f32 %v560, %v560
        %v565 = vmul.f32 %v561, %v561
        %v566 = vmul.f32 %v562, %v562
        %v567 = vmul.f32 %v559, %v561
        %v568 = vmul.f32 %v560, %v562
        %v569 = vmul.f32 %v567, 2.0
        %v570 = vmul.f32 %v568, 2.0
        %v571 = vstv %s284
        %v572 = vadd.f32 %v569, %v571
        %v573 = vadd.f32 %v570, %v571
        %v574 = vadd.f32 %v563, %v565
        %v575 = vadd.f32 %v564, %v566
        %v576 = vadd.f32 %v574, %v571
        %v577 = vadd.f32 %v575, %v571
        %v578 = vmul.f32 %v549, %v551
        %v579 = vmul.f32 %v550, %v552
        %v580 = vsub.f32 %v557, %v578
        %v581 = vsub.f32 %v558, %v579
        %v582 = vmul.f32 %v580, 2.0416667
        %v583 = vmul.f32 %v581, 2.0416667
        %v584 = vstv %s286
        %v585 = vadd.f32 %v582, %v584
        %v586 = vadd.f32 %v583, %v584
        %v587 = vadd.f32 %v553, %v555
        %v588 = vadd.f32 %v554, %v556
        %v589 = vmul.f32 %v549, %v549
        %v590 = vmul.f32 %v550, %v550
        %v591 = vmul.f32 %v551, %v551
        %v592 = vmul.f32 %v552, %v552
        %v593 = vadd.f32 %v589, %v591
        %v594 = vadd.f32 %v590, %v592
        %v595 = vsub.f32 %v587, %v593
        %v596 = vsub.f32 %v588, %v594
        %v597 = vmul.f32 %v595, 1.0208334
        %v598 = vmul.f32 %v596, 1.0208334
        %v599 = vadd.f32 %v597, %v584
        %v600 = vadd.f32 %v598, %v584
        %v601 = vmul.f32 %v576, %v599
        %v602 = vmul.f32 %v577, %v600
        %v603 = vrcp.pop %v601
        %v604 = vrcp.pop %v602
        %v605 = vmul.f32 %v601, %v603
        %v606 = vmul.f32 %v602, %v604
        %v607 = vsub.f32 2.0, %v605
        %v608 = vsub.f32 2.0, %v606
        %v609 = vmul.f32 %v603, %v607
        %v610 = vmul.f32 %v604, %v608
        %v611 = vmul.f32 %v572, %v585
        %v612 = vmul.f32 %v573, %v586
        %v613 = vmul.f32 %v611, %v609
        %v614 = vmul.f32 %v612, %v610
        %vm615 = vcmask 80896
        %v616 = vsel %vm615, %v613, 0.0
        %vm617 = vcmask 74752
        %v618 = vsel %vm617, %v614, 0.0
        %v619 = vadd.f32 %v616, %v618
        %620 = vadd.xlane.f32.xlu0 %v619
        %v621 = vpop.xlane.xlu0 %620
        %v622 = vrot.slane %v621, 4
        %v623 = vadd.f32 %v621, %v622
        %v624 = vrot.slane %v623, 2
        %v625 = vadd.f32 %v623, %v624
        %v626 = vrot.slane %v625, 1
        %v627 = vadd.f32 %v625, %v626
        %s628 = vtos %v627
        %v629 = vstv %s628
        %vm630 = vcmask 0
        %631 = vst.msk [vmem:[%s272] sm:$0x1] %vm630, %v629
        %p632 = scmp.lt.s32.totalorder %s26, 1
        %s633 = scalar_select %p632, %s26, 1
        %s634 = scalar_lea.vmem %s5, %s633
        // Predicated region
        $region49: #{tpu_custom_call.1} parent=35 // pred_check
          %p635 = pneg %p138
        $region50: #{tpu_custom_call.1} parent=35 // pred_check_branch
          %637 = sbr.rel (%p635) target = $region52
        $region51: #{tpu_custom_call.1} parent=35 // pred_region
          _
        $region52: #{tpu_custom_call.1} parent=35 // pred_fallthru
          _
      $region36: #{tpu_custom_call.1} parent=5 // pred_fallthru
        _
      %p638 = scmp.le.s32.totalorder 2, %s21
      // Predicated region
      $region53: #{tpu_custom_call.1} parent=5 // pred_check
        %p639 = pneg %p638
      $region54: #{tpu_custom_call.1} parent=5 // pred_check_branch
        %641 = sbr.rel (%p639) target = $region56
      $region55: #{tpu_custom_call.1} parent=5 // pred_region
        %s642 = ssub.s32 %s21, 2
        // Predicated region
        $region57: #{tpu_custom_call.1} parent=55 // pred_check
          %p643 = pneg %p144
        $region58: #{tpu_custom_call.1} parent=55 // pred_check_branch
          %645 = sbr.rel (%p643) target = $region60
        $region59: #{tpu_custom_call.1} parent=55 // pred_region
          %p646 = scmp.lt.s32.totalorder %s27, 1
          %s647 = scalar_select %p646, %s27, 1
          %s648 = scalar_lea.vmem %s5, %s647
        $region60: #{tpu_custom_call.1} parent=55 // pred_fallthru
          _
      $region56: #{tpu_custom_call.1} parent=5 // pred_fallthru
        _
    $region6: #{tpu_custom_call.1} parent=1 // loop_footer
      %s25 = sadd.s32 1, %s21
    $region7: #{tpu_custom_call.1} parent=1 // loop_footer_branch
      %20 = sbr.rel target = $region3
    $region8: #{tpu_custom_call.1} parent=1 // loop_exit
      _
    %649 = vsyncpa [#allocation5], 1
    %s650 = scalar_lea.sflag [#allocation5], 1
    %651 = vsyncpa %s650, 1
    %652 = vsyncpa [#allocation7], 1
    %s653 = scalar_lea.sflag [#allocation7], 1
    %654 = vsyncpa %s653, 1

</llo_original>
